<compile_context>
chip_gen: v6e
topology: v6e:2x2x1
jax: 0.10.0
libtpu: 0.0.40
codegen_flags: <defaults>
</compile_context>

<pallas_src>
import functools

import jax
import jax.numpy as jnp
from jax.experimental import pallas as pl
from jax.experimental.pallas import tpu as pltpu

EPS = 1e-8
LANE = 128
SUBLANE = 8


def _round_up(x, m):
    return ((x + m - 1) // m) * m


# --------------------------------------------------------------------------- #
# Kernel: one grid step = one RL3.forward() step for one batch tile.
# --------------------------------------------------------------------------- #
def _rl3_rollout_kernel(
    # inputs
    hx0_ref, x2_ref, zi_ref, zh_ref, zm_ref,
    wih_ref, bih_ref, whh_ref, bhh_ref, wo_ref, bo_ref,
    # outputs
    out_ref, hfin_ref,
    # scratch
    h_sc,
    *, hp, ap,
):
    t = pl.program_id(1)
    G = 3 * hp

    # Initialize the recurrent state for this batch tile.
    @pl.when(t == 0)
    def _():
        h_sc[...] = hx0_ref[...]

    h = h_sc[...]                                   # (Bt, Hp)

    # ---- Probabilistic GRU cell: fused [mean | var] contractions (block-diag RHS) ----
    # x2 = [x | x*x] precomputed in the wrapper (avoids an unaligned in-kernel concat).
    gi_mv = jnp.dot(x2_ref[0], wih_ref[...],
                    preferred_element_type=jnp.float32) + bih_ref[...]      # (Bt, 6Hp)
    hh = jnp.concatenate([h, h * h], axis=-1)                               # (Bt, 2Hp), lane-aligned
    gh_mv = jnp.dot(hh, whh_ref[...],
                    preferred_element_type=jnp.float32) + bhh_ref[...]      # (Bt, 6Hp)

    gi = gi_mv[:, :G] + jnp.sqrt(gi_mv[:, G:] + EPS) * zi_ref[0]            # (Bt, 3Hp)
    gh = gh_mv[:, :G] + jnp.sqrt(gh_mv[:, G:] + EPS) * zh_ref[0]            # (Bt, 3Hp)

    # torch.nn.GRUCell gate order (r, z, n); each gate is its own 128-lane block.
    r = jax.nn.sigmoid(gi[:, :hp] + gh[:, :hp])
    z = jax.nn.sigmoid(gi[:, hp:2 * hp] + gh[:, hp:2 * hp])
    n = jnp.tanh(gi[:, 2 * hp:] + r * gh[:, 2 * hp:])
    h_new = (1.0 - z) * n + z * h
    h_sc[...] = h_new

    # ---- LinearGaussian output head: fused [mean | var] contraction ----
    ho = jnp.concatenate([h_new, h_new * h_new], axis=-1)                   # (Bt, 2Hp)
    o_mv = jnp.dot(ho, wo_ref[...],
                   preferred_element_type=jnp.float32) + bo_ref[...]        # (Bt, 2Ap)
    out_ref[0] = o_mv[:, :ap] + jnp.sqrt(o_mv[:, ap:] + EPS) * zm_ref[0]

    # Final hidden state for this batch tile.
    @pl.when(t == pl.num_programs(1) - 1)
    def _():
        hfin_ref[...] = h_new


# --------------------------------------------------------------------------- #
# Parameter construction / packing.
# --------------------------------------------------------------------------- #
def init_params(key, num_states, num_hidden, num_actions, logsig_init=-3.0):
    """Raw params in torch layout (out_features x in_features); fixed log-sigma."""
    ks = jax.random.split(key, 6)
    s = 0.1
    var = jnp.exp(jnp.asarray(2.0 * logsig_init, jnp.float32))   # sigma^2
    H3 = 3 * num_hidden
    return {
        "w_ih": s * jax.random.normal(ks[0], (H3, num_states), jnp.float32),
        "v_ih": jnp.full((H3, num_states), var, jnp.float32),
        "b_ih": s * jax.random.normal(ks[1], (H3,), jnp.float32),
        "w_hh": s * jax.random.normal(ks[2], (H3, num_hidden), jnp.float32),
        "v_hh": jnp.full((H3, num_hidden), var, jnp.float32),
        "b_hh": s * jax.random.normal(ks[3], (H3,), jnp.float32),
        "w_o": s * jax.random.normal(ks[4], (num_actions, num_hidden), jnp.float32),
        "v_o": jnp.full((num_actions, num_hidden), var, jnp.float32),
        "b_o": s * jax.random.normal(ks[5], (num_actions,), jnp.float32),
    }


def prepare_params(p, num_states, num_hidden, num_actions):
    """Fuse (W, sigma^2) into block-diagonal, gate-padded, lane-dense kernel weights."""
    S, H, A = num_states, num_hidden, num_actions
    HP = _round_up(H, LANE)
    AP = _round_up(A, LANE)

    def gate_pad_t(w):  # (3H, In) -> (In, 3*HP), gate g in lanes [g*HP, g*HP+H)
        In = w.shape[1]
        out = jnp.zeros((3, HP, In), jnp.float32).at[:, :H, :].set(w.reshape(3, H, In))
        return out.reshape(3 * HP, In).T

    def gate_pad_b(b):  # (3H,) -> (1, 3*HP)
        out = jnp.zeros((3, HP), jnp.float32).at[:, :H].set(b.reshape(3, H))
        return out.reshape(1, 3 * HP)

    def rows_pad(m, rows):
        return jnp.zeros((rows, m.shape[1]), jnp.float32).at[: m.shape[0]].set(m)

    def block_diag(a, b):
        ra, ca = a.shape
        rb, cb = b.shape
        out = jnp.zeros((ra + rb, ca + cb), jnp.float32)
        return out.at[:ra, :ca].set(a).at[ra:, ca:].set(b)

    w_ih_t = gate_pad_t(p["w_ih"])                    # (S, 3HP)
    v_ih_t = gate_pad_t(p["v_ih"])                    # (S, 3HP)
    w_hh_t = rows_pad(gate_pad_t(p["w_hh"]), HP)      # (HP, 3HP)
    v_hh_t = rows_pad(gate_pad_t(p["v_hh"]), HP)
    w_o_t = rows_pad(jnp.zeros((H, AP), jnp.float32).at[:, :A].set(p["w_o"].T), HP)
    v_o_t = rows_pad(jnp.zeros((H, AP), jnp.float32).at[:, :A].set(p["v_o"].T), HP)

    zeros3 = jnp.zeros((1, 3 * HP), jnp.float32)
    return {
        "w_ih_f": block_diag(w_ih_t, v_ih_t),                                  # (2S, 6HP)
        "b_ih_f": jnp.concatenate([gate_pad_b(p["b_ih"]), zeros3], axis=-1),   # (1, 6HP)
        "w_hh_f": block_diag(w_hh_t, v_hh_t),                                  # (2HP, 6HP)
        "b_hh_f": jnp.concatenate([gate_pad_b(p["b_hh"]), zeros3], axis=-1),   # (1, 6HP)
        "w_o_f": block_diag(w_o_t, v_o_t),                                     # (2HP, 2AP)
        "b_o_f": jnp.zeros((1, 2 * AP), jnp.float32).at[0, :A].set(p["b_o"]),  # (1, 2AP)
        "S": S, "H": H, "A": A, "HP": HP, "AP": AP,
    }


# --------------------------------------------------------------------------- #
# Wrapper: T-step rollout in a single pallas_call (weights stay resident).
# --------------------------------------------------------------------------- #
def rl3_rollout(xs, hx0, zeta_gru, zeta_mu, kp):
    """Applies RL3.forward for T steps. Returns (outputs (T,B,A), final hidden (B,H))."""
    T, B, S = xs.shape
    H, A, HP, AP = kp["H"], kp["A"], kp["HP"], kp["AP"]
    BP = _round_up(B, SUBLANE)
    BT = 128 if BP % 128 == 0 else 8          # batch tile (sublane aligned)

    # Pad activations/noise to lane/sublane-dense shapes; precompute [x | x*x].
    x2 = jnp.zeros((T, BP, 2 * S), jnp.float32)
    x2 = x2.at[:, :B, :S].set(xs).at[:, :B, S:].set(xs * xs)

    def pad_gate_noise(z):                    # (T, B, 3H) -> (T, BP, 3HP)
        out = jnp.zeros((T, BP, 3, HP), jnp.float32)
        return out.at[:, :B, :, :H].set(z.reshape(T, B, 3, H)).reshape(T, BP, 3 * HP)

    zi = pad_gate_noise(zeta_gru[:, :, : 3 * H])
    zh = pad_gate_noise(zeta_gru[:, :, 3 * H:])
    zm = jnp.zeros((T, BP, AP), jnp.float32).at[:, :B, :A].set(zeta_mu)
    h0 = jnp.zeros((BP, HP), jnp.float32).at[:B, :H].set(hx0)

    kernel = functools.partial(_rl3_rollout_kernel, hp=HP, ap=AP)

    outs, h_fin = pl.pallas_call(
        kernel,
        out_shape=(
            jax.ShapeDtypeStruct((T, BP, AP), jnp.float32),
            jax.ShapeDtypeStruct((BP, HP), jnp.float32),
        ),
        grid_spec=pltpu.PrefetchScalarGridSpec(
            num_scalar_prefetch=0,
            grid=(BP // BT, T),
            in_specs=[
                pl.BlockSpec((BT, HP), lambda b, t: (b, 0)),              # hx0
                pl.BlockSpec((1, BT, 2 * S), lambda b, t: (t, b, 0)),     # [x | x^2]
                pl.BlockSpec((1, BT, 3 * HP), lambda b, t: (t, b, 0)),    # zeta_ih
                pl.BlockSpec((1, BT, 3 * HP), lambda b, t: (t, b, 0)),    # zeta_hh
                pl.BlockSpec((1, BT, AP), lambda b, t: (t, b, 0)),        # zeta_mu
                pl.BlockSpec((2 * S, 6 * HP), lambda b, t: (0, 0)),       # weights: resident
                pl.BlockSpec((1, 6 * HP), lambda b, t: (0, 0)),
                pl.BlockSpec((2 * HP, 6 * HP), lambda b, t: (0, 0)),
                pl.BlockSpec((1, 6 * HP), lambda b, t: (0, 0)),
                pl.BlockSpec((2 * HP, 2 * AP), lambda b, t: (0, 0)),
                pl.BlockSpec((1, 2 * AP), lambda b, t: (0, 0)),
            ],
            out_specs=(
                pl.BlockSpec((1, BT, AP), lambda b, t: (t, b, 0)),        # per-step outputs
                pl.BlockSpec((BT, HP), lambda b, t: (b, 0)),              # final hidden
            ),
            scratch_shapes=[pltpu.VMEM((BT, HP), jnp.float32)],           # recurrent state
        ),
        compiler_params=pltpu.CompilerParams(
            dimension_semantics=("parallel", "arbitrary"),
        ),
        input_output_aliases={0: 1},   # reuse the hx buffer for the final hidden state
    )(
        h0, x2, zi, zh, zm,
        kp["w_ih_f"], kp["b_ih_f"], kp["w_hh_f"], kp["b_hh_f"],
        kp["w_o_f"], kp["b_o_f"],
    )
    return outs[:, :B, :A], h_fin[:B, :H]


def rl3_forward(x, hx, zeta_gru_step, zeta_mu_step, kp):
    """Single-step forward matching RL3.forward(input, hx, zeta) -> (mu, hx_new)."""
    outs, h_new = rl3_rollout(x[None], hx, zeta_gru_step[None], zeta_mu_step[None], kp)
    return outs[0], h_new


# --------------------------------------------------------------------------- #
# Pure-JAX reference (unpadded, unfused) for correctness checking.
# --------------------------------------------------------------------------- #
def _reference_step(x, h, zi, zh, zm, p):
    H = h.shape[1]
    gi = x @ p["w_ih"].T + p["b_ih"] + jnp.sqrt((x * x) @ p["v_ih"].T + EPS) * zi
    gh = h @ p["w_hh"].T + p["b_hh"] + jnp.sqrt((h * h) @ p["v_hh"].T + EPS) * zh
    r = jax.nn.sigmoid(gi[:, :H] + gh[:, :H])
    z = jax.nn.sigmoid(gi[:, H:2 * H] + gh[:, H:2 * H])
    n = jnp.tanh(gi[:, 2 * H:] + r * gh[:, 2 * H:])
    h_new = (1.0 - z) * n + z * h
    out = h_new @ p["w_o"].T + p["b_o"] + jnp.sqrt((h_new * h_new) @ p["v_o"].T + EPS) * zm
    return out, h_new


if __name__ == "__main__":
    # Small shapes implied by the module: num_states, num_hidden, num_actions + rollout length.
    B, S, H, A, T = 2, 4, 32, 5, 8

    key = jax.random.PRNGKey(0)
    kparam, kx, kz0, kz1 = jax.random.split(key, 4)

    raw = init_params(kparam, S, H, A)
    kp = prepare_params(raw, S, H, A)

    xs = jax.random.normal(kx, (T, B, S), jnp.float32)
    hx0 = jnp.zeros((B, H), jnp.float32)                       # initial_states(B) = 0 * randn
    zeta_gru = jax.random.normal(kz0, (T, B, 6 * H), jnp.float32)   # gru.get_zeta(B) per step
    zeta_mu = jax.random.normal(kz1, (T, B, A), jnp.float32)        # mu.get_zeta(B) per step

    outs, h_fin = jax.block_until_ready(rl3_rollout(xs, hx0, zeta_gru, zeta_mu, kp))

    # Reference: apply RL3.forward T times.
    h_ref = hx0
    ref_outs = []
    for t in range(T):
        o, h_ref = _reference_step(
            xs[t], h_ref,
            zeta_gru[t, :, : 3 * H], zeta_gru[t, :, 3 * H:],
            zeta_mu[t], raw,
        )
        ref_outs.append(o)
    ref_outs = jnp.stack(ref_outs)

    assert outs.shape == (T, B, A) and h_fin.shape == (B, H)
    assert jnp.allclose(outs, ref_outs, atol=1e-4, rtol=1e-4), "output mismatch vs reference"
    assert jnp.allclose(h_fin, h_ref, atol=1e-4, rtol=1e-4), "hidden-state mismatch vs reference"

    print("KERNEL_OK")
</pallas_src>

<mosaic_0001>
module attributes {stable_mosaic.version = 11 : i64} {
  func.func @_rl3_rollout_kernel(%arg0: i32, %arg1: i32, %arg2: memref<8x128xf32, #tpu.memory_space<vmem>>, %arg3: memref<1x8x8xf32, #tpu.memory_space<vmem>>, %arg4: memref<1x8x384xf32, #tpu.memory_space<vmem>>, %arg5: memref<1x8x384xf32, #tpu.memory_space<vmem>>, %arg6: memref<1x8x128xf32, #tpu.memory_space<vmem>>, %arg7: memref<8x768xf32, #tpu.memory_space<vmem>>, %arg8: memref<1x768xf32, #tpu.memory_space<vmem>>, %arg9: memref<256x768xf32, #tpu.memory_space<vmem>>, %arg10: memref<1x768xf32, #tpu.memory_space<vmem>>, %arg11: memref<256x256xf32, #tpu.memory_space<vmem>>, %arg12: memref<1x256xf32, #tpu.memory_space<vmem>>, %arg13: memref<1x8x128xf32, #tpu.memory_space<vmem>>, %arg14: memref<8x128xf32, #tpu.memory_space<vmem>>, %arg15: memref<8x128xf32, #tpu.memory_space<vmem>>) attributes {dimension_semantics = [#tpu.dimension_semantics<parallel>, #tpu.dimension_semantics<arbitrary>], iteration_bounds = array<i64: 1, 8>, scalar_prefetch = 0 : i64, scratch_operands = 1 : i64, tpu.core_type = #tpu.core_type<tc>, window_params = [{transform_indices = @transform_0, window_bounds = array<i64: 8, 128>}, {transform_indices = @transform_1, window_bounds = array<i64: 1, 8, 8>}, {transform_indices = @transform_2, window_bounds = array<i64: 1, 8, 384>}, {transform_indices = @transform_3, window_bounds = array<i64: 1, 8, 384>}, {transform_indices = @transform_4, window_bounds = array<i64: 1, 8, 128>}, {pipeline_mode = #tpu.pipeline_mode<synchronous>, transform_indices = @transform_5, window_bounds = array<i64: 8, 768>}, {pipeline_mode = #tpu.pipeline_mode<synchronous>, transform_indices = @transform_6, window_bounds = array<i64: 1, 768>}, {pipeline_mode = #tpu.pipeline_mode<synchronous>, transform_indices = @transform_7, window_bounds = array<i64: 256, 768>}, {pipeline_mode = #tpu.pipeline_mode<synchronous>, transform_indices = @transform_8, window_bounds = array<i64: 1, 768>}, {pipeline_mode = #tpu.pipeline_mode<synchronous>, transform_indices = @transform_9, window_bounds = array<i64: 256, 256>}, {pipeline_mode = #tpu.pipeline_mode<synchronous>, transform_indices = @transform_10, window_bounds = array<i64: 1, 256>}, {transform_indices = @transform_11, window_bounds = array<i64: 1, 8, 128>}, {transform_indices = @transform_12, window_bounds = array<i64: 8, 128>}]} {
    %c0_i32 = arith.constant 0 : i32
    %0 = arith.cmpi eq, %arg1, %c0_i32 : i32
    %1 = arith.extui %0 : i1 to i32
    %c0_i32_0 = arith.constant 0 : i32
    %2 = arith.cmpi ne, %1, %c0_i32_0 : i32
    scf.if %2 {
      %c0_40 = arith.constant 0 : index
      %c0_41 = arith.constant 0 : index
      %85 = vector.load %arg2[%c0_40, %c0_41] : memref<8x128xf32, #tpu.memory_space<vmem>>, vector<8x128xf32>
      %c0_42 = arith.constant 0 : index
      %c0_43 = arith.constant 0 : index
      %86 = vector.load %arg15[%c0_42, %c0_43] : memref<8x128xf32, #tpu.memory_space<vmem>>, vector<8x128xf32>
      tpu.vector_store %arg15[%c0_42, %c0_43], %85 {strides = array<i32>} : memref<8x128xf32, #tpu.memory_space<vmem>>, vector<8x128xf32>,
    } else {
    }
    %c0 = arith.constant 0 : index
    %c0_1 = arith.constant 0 : index
    %3 = vector.load %arg15[%c0, %c0_1] : memref<8x128xf32, #tpu.memory_space<vmem>>, vector<8x128xf32>
    %c0_2 = arith.constant 0 : index
    %c0_3 = arith.constant 0 : index
    %c0_4 = arith.constant 0 : index
    %4 = vector.load %arg3[%c0_2, %c0_3, %c0_4] : memref<1x8x8xf32, #tpu.memory_space<vmem>>, vector<1x8x8xf32>
    %5 = vector.shape_cast %4 : vector<1x8x8xf32> to vector<8x8xf32>
    %c0_5 = arith.constant 0 : index
    %c0_6 = arith.constant 0 : index
    %6 = vector.load %arg7[%c0_5, %c0_6] : memref<8x768xf32, #tpu.memory_space<vmem>>, vector<8x768xf32>
    %cst = arith.constant dense<0.000000e+00> : vector<8x768xf32>
    %7 = tpu.matmul %5, %6, %cst {dimension_numbers = #tpu.dot_dimension_numbers<[1], [0], [0], [1], [0, 0, 1, 1], [], []>} : vector<8x8xf32>, vector<8x768xf32>, vector<8x768xf32> -> vector<8x768xf32>
    %c0_7 = arith.constant 0 : index
    %c0_8 = arith.constant 0 : index
    %8 = vector.load %arg8[%c0_7, %c0_8] : memref<1x768xf32, #tpu.memory_space<vmem>>, vector<1x768xf32>
    %9 = vector.broadcast %8 : vector<1x768xf32> to vector<8x768xf32>
    %10 = arith.addf %7, %9 : vector<8x768xf32>
    %11 = arith.mulf %3, %3 : vector<8x128xf32>
    %12 = tpu.concatenate %3, %11 in 1 : vector<8x128xf32>, vector<8x128xf32> -> vector<8x256xf32>
    %c0_9 = arith.constant 0 : index
    %c0_10 = arith.constant 0 : index
    %13 = vector.load %arg9[%c0_9, %c0_10] : memref<256x768xf32, #tpu.memory_space<vmem>>, vector<256x768xf32>
    %cst_11 = arith.constant dense<0.000000e+00> : vector<8x768xf32>
    %14 = tpu.matmul %12, %13, %cst_11 {dimension_numbers = #tpu.dot_dimension_numbers<[1], [0], [0], [1], [0, 0, 1, 1], [], []>} : vector<8x256xf32>, vector<256x768xf32>, vector<8x768xf32> -> vector<8x768xf32>
    %c0_12 = arith.constant 0 : index
    %c0_13 = arith.constant 0 : index
    %15 = vector.load %arg10[%c0_12, %c0_13] : memref<1x768xf32, #tpu.memory_space<vmem>>, vector<1x768xf32>
    %16 = vector.broadcast %15 : vector<1x768xf32> to vector<8x768xf32>
    %17 = arith.addf %14, %16 : vector<8x768xf32>
    %18 = vector.extract_strided_slice %10 {offsets = [0, 0], sizes = [8, 384], strides = [1, 1]} : vector<8x768xf32> to vector<8x384xf32>
    %19 = vector.extract_strided_slice %10 {offsets = [0, 384], sizes = [8, 384], strides = [1, 1]} : vector<8x768xf32> to vector<8x384xf32>
    %cst_14 = arith.constant 9.99999993E-9 : f32
    %20 = vector.broadcast %cst_14 : f32 to vector<8x384xf32>
    %21 = arith.addf %19, %20 : vector<8x384xf32>
    %22 = math.sqrt %21 : vector<8x384xf32>
    %c0_15 = arith.constant 0 : index
    %c0_16 = arith.constant 0 : index
    %c0_17 = arith.constant 0 : index
    %23 = vector.load %arg4[%c0_15, %c0_16, %c0_17] : memref<1x8x384xf32, #tpu.memory_space<vmem>>, vector<1x8x384xf32>
    %24 = vector.shape_cast %23 : vector<1x8x384xf32> to vector<8x384xf32>
    %25 = arith.mulf %22, %24 : vector<8x384xf32>
    %26 = arith.addf %18, %25 : vector<8x384xf32>
    %27 = vector.extract_strided_slice %17 {offsets = [0, 0], sizes = [8, 384], strides = [1, 1]} : vector<8x768xf32> to vector<8x384xf32>
    %28 = vector.extract_strided_slice %17 {offsets = [0, 384], sizes = [8, 384], strides = [1, 1]} : vector<8x768xf32> to vector<8x384xf32>
    %cst_18 = arith.constant 9.99999993E-9 : f32
    %29 = vector.broadcast %cst_18 : f32 to vector<8x384xf32>
    %30 = arith.addf %28, %29 : vector<8x384xf32>
    %31 = math.sqrt %30 : vector<8x384xf32>
    %c0_19 = arith.constant 0 : index
    %c0_20 = arith.constant 0 : index
    %c0_21 = arith.constant 0 : index
    %32 = vector.load %arg5[%c0_19, %c0_20, %c0_21] : memref<1x8x384xf32, #tpu.memory_space<vmem>>, vector<1x8x384xf32>
    %33 = vector.shape_cast %32 : vector<1x8x384xf32> to vector<8x384xf32>
    %34 = arith.mulf %31, %33 : vector<8x384xf32>
    %35 = arith.addf %27, %34 : vector<8x384xf32>
    %36 = vector.extract_strided_slice %26 {offsets = [0, 0], sizes = [8, 128], strides = [1, 1]} : vector<8x384xf32> to vector<8x128xf32>
    %37 = vector.extract_strided_slice %35 {offsets = [0, 0], sizes = [8, 128], strides = [1, 1]} : vector<8x384xf32> to vector<8x128xf32>
    %38 = arith.addf %36, %37 : vector<8x128xf32>
    %39 = arith.negf %38 : vector<8x128xf32>
    %40 = math.exp %39 : vector<8x128xf32>
    %cst_22 = arith.constant 1.000000e+00 : f32
    %41 = vector.broadcast %cst_22 : f32 to vector<8x128xf32>
    %42 = arith.addf %41, %40 : vector<8x128xf32>
    %43 = arith.divf %41, %42 : vector<8x128xf32>
    %44 = vector.extract_strided_slice %26 {offsets = [0, 128], sizes = [8, 128], strides = [1, 1]} : vector<8x384xf32> to vector<8x128xf32>
    %45 = vector.extract_strided_slice %35 {offsets = [0, 128], sizes = [8, 128], strides = [1, 1]} : vector<8x384xf32> to vector<8x128xf32>
    %46 = arith.addf %44, %45 : vector<8x128xf32>
    %47 = arith.negf %46 : vector<8x128xf32>
    %48 = math.exp %47 : vector<8x128xf32>
    %cst_23 = arith.constant 1.000000e+00 : f32
    %49 = vector.broadcast %cst_23 : f32 to vector<8x128xf32>
    %50 = arith.addf %49, %48 : vector<8x128xf32>
    %51 = arith.divf %49, %50 : vector<8x128xf32>
    %52 = vector.extract_strided_slice %26 {offsets = [0, 256], sizes = [8, 128], strides = [1, 1]} : vector<8x384xf32> to vector<8x128xf32>
    %53 = vector.extract_strided_slice %35 {offsets = [0, 256], sizes = [8, 128], strides = [1, 1]} : vector<8x384xf32> to vector<8x128xf32>
    %54 = arith.mulf %43, %53 : vector<8x128xf32>
    %55 = arith.addf %52, %54 : vector<8x128xf32>
    %56 = math.tanh %55 : vector<8x128xf32>
    %cst_24 = arith.constant 1.000000e+00 : f32
    %57 = vector.broadcast %cst_24 : f32 to vector<8x128xf32>
    %58 = arith.subf %57, %51 : vector<8x128xf32>
    %59 = arith.mulf %58, %56 : vector<8x128xf32>
    %60 = arith.mulf %51, %3 : vector<8x128xf32>
    %61 = arith.addf %59, %60 : vector<8x128xf32>
    %c0_25 = arith.constant 0 : index
    %c0_26 = arith.constant 0 : index
    %62 = vector.load %arg15[%c0_25, %c0_26] : memref<8x128xf32, #tpu.memory_space<vmem>>, vector<8x128xf32>
    tpu.vector_store %arg15[%c0_25, %c0_26], %61 {strides = array<i32>} : memref<8x128xf32, #tpu.memory_space<vmem>>, vector<8x128xf32>,
    %63 = arith.mulf %61, %61 : vector<8x128xf32>
    %64 = tpu.concatenate %61, %63 in 1 : vector<8x128xf32>, vector<8x128xf32> -> vector<8x256xf32>
    %c0_27 = arith.constant 0 : index
    %c0_28 = arith.constant 0 : index
    %65 = vector.load %arg11[%c0_27, %c0_28] : memref<256x256xf32, #tpu.memory_space<vmem>>, vector<256x256xf32>
    %cst_29 = arith.constant dense<0.000000e+00> : vector<8x256xf32>
    %66 = tpu.matmul %64, %65, %cst_29 {dimension_numbers = #tpu.dot_dimension_numbers<[1], [0], [0], [1], [0, 0, 1, 1], [], []>} : vector<8x256xf32>, vector<256x256xf32>, vector<8x256xf32> -> vector<8x256xf32>
    %c0_30 = arith.constant 0 : index
    %c0_31 = arith.constant 0 : index
    %67 = vector.load %arg12[%c0_30, %c0_31] : memref<1x256xf32, #tpu.memory_space<vmem>>, vector<1x256xf32>
    %68 = vector.broadcast %67 : vector<1x256xf32> to vector<8x256xf32>
    %69 = arith.addf %66, %68 : vector<8x256xf32>
    %70 = vector.extract_strided_slice %69 {offsets = [0, 0], sizes = [8, 128], strides = [1, 1]} : vector<8x256xf32> to vector<8x128xf32>
    %71 = vector.extract_strided_slice %69 {offsets = [0, 128], sizes = [8, 128], strides = [1, 1]} : vector<8x256xf32> to vector<8x128xf32>
    %cst_32 = arith.constant 9.99999993E-9 : f32
    %72 = vector.broadcast %cst_32 : f32 to vector<8x128xf32>
    %73 = arith.addf %71, %72 : vector<8x128xf32>
    %74 = math.sqrt %73 : vector<8x128xf32>
    %c0_33 = arith.constant 0 : index
    %c0_34 = arith.constant 0 : index
    %c0_35 = arith.constant 0 : index
    %75 = vector.load %arg6[%c0_33, %c0_34, %c0_35] : memref<1x8x128xf32, #tpu.memory_space<vmem>>, vector<1x8x128xf32>
    %76 = vector.shape_cast %75 : vector<1x8x128xf32> to vector<8x128xf32>
    %77 = arith.mulf %74, %76 : vector<8x128xf32>
    %78 = arith.addf %70, %77 : vector<8x128xf32>
    %c0_36 = arith.constant 0 : index
    %c0_37 = arith.constant 0 : index
    %c0_38 = arith.constant 0 : index
    %79 = vector.load %arg13[%c0_36, %c0_37, %c0_38] : memref<1x8x128xf32, #tpu.memory_space<vmem>>, vector<1x8x128xf32>
    %80 = vector.shape_cast %79 : vector<1x8x128xf32> to vector<8x128xf32>
    %81 = vector.shape_cast %78 : vector<8x128xf32> to vector<1x8x128xf32>
    tpu.vector_store %arg13[%c0_36, %c0_37, %c0_38], %81 {strides = array<i32>} : memref<1x8x128xf32, #tpu.memory_space<vmem>>, vector<1x8x128xf32>,
    %c7_i32 = arith.constant 7 : i32
    %82 = arith.cmpi eq, %arg1, %c7_i32 : i32
    %83 = arith.extui %82 : i1 to i32
    %c0_i32_39 = arith.constant 0 : i32
    %84 = arith.cmpi ne, %83, %c0_i32_39 : i32
    scf.if %84 {
      %c0_40 = arith.constant 0 : index
      %c0_41 = arith.constant 0 : index
      %85 = vector.load %arg14[%c0_40, %c0_41] : memref<8x128xf32, #tpu.memory_space<vmem>>, vector<8x128xf32>
      tpu.vector_store %arg14[%c0_40, %c0_41], %61 {strides = array<i32>} : memref<8x128xf32, #tpu.memory_space<vmem>>, vector<8x128xf32>,
    } else {
    }
    return
  }
  func.func @transform_0(%arg0: i32, %arg1: i32) -> (i32, i32) {
    %c0_i32 = arith.constant 0 : i32
    %c0_i32_0 = arith.constant 0 : i32
    return %arg0, %c0_i32 : i32, i32
  }
  func.func @transform_1(%arg0: i32, %arg1: i32) -> (i32, i32, i32) {
    %c0_i32 = arith.constant 0 : i32
    %c0_i32_0 = arith.constant 0 : i32
    return %arg1, %arg0, %c0_i32 : i32, i32, i32
  }
  func.func @transform_2(%arg0: i32, %arg1: i32) -> (i32, i32, i32) {
    %c0_i32 = arith.constant 0 : i32
    %c0_i32_0 = arith.constant 0 : i32
    return %arg1, %arg0, %c0_i32 : i32, i32, i32
  }
  func.func @transform_3(%arg0: i32, %arg1: i32) -> (i32, i32, i32) {
    %c0_i32 = arith.constant 0 : i32
    %c0_i32_0 = arith.constant 0 : i32
    return %arg1, %arg0, %c0_i32 : i32, i32, i32
  }
  func.func @transform_4(%arg0: i32, %arg1: i32) -> (i32, i32, i32) {
    %c0_i32 = arith.constant 0 : i32
    %c0_i32_0 = arith.constant 0 : i32
    return %arg1, %arg0, %c0_i32 : i32, i32, i32
  }
  func.func @transform_5(%arg0: i32, %arg1: i32) -> (i32, i32) {
    %c0_i32 = arith.constant 0 : i32
    %c0_i32_0 = arith.constant 0 : i32
    %c0_i32_1 = arith.constant 0 : i32
    return %c0_i32, %c0_i32_0 : i32, i32
  }
  func.func @transform_6(%arg0: i32, %arg1: i32) -> (i32, i32) {
    %c0_i32 = arith.constant 0 : i32
    %c0_i32_0 = arith.constant 0 : i32
    %c0_i32_1 = arith.constant 0 : i32
    return %c0_i32, %c0_i32_0 : i32, i32
  }
  func.func @transform_7(%arg0: i32, %arg1: i32) -> (i32, i32) {
    %c0_i32 = arith.constant 0 : i32
    %c0_i32_0 = arith.constant 0 : i32
    %c0_i32_1 = arith.constant 0 : i32
    return %c0_i32, %c0_i32_0 : i32, i32
  }
  func.func @transform_8(%arg0: i32, %arg1: i32) -> (i32, i32) {
    %c0_i32 = arith.constant 0 : i32
    %c0_i32_0 = arith.constant 0 : i32
    %c0_i32_1 = arith.constant 0 : i32
    return %c0_i32, %c0_i32_0 : i32, i32
  }
  func.func @transform_9(%arg0: i32, %arg1: i32) -> (i32, i32) {
    %c0_i32 = arith.constant 0 : i32
    %c0_i32_0 = arith.constant 0 : i32
    %c0_i32_1 = arith.constant 0 : i32
    return %c0_i32, %c0_i32_0 : i32, i32
  }
  func.func @transform_10(%arg0: i32, %arg1: i32) -> (i32, i32) {
    %c0_i32 = arith.constant 0 : i32
    %c0_i32_0 = arith.constant 0 : i32
    %c0_i32_1 = arith.constant 0 : i32
    return %c0_i32, %c0_i32_0 : i32, i32
  }
  func.func @transform_11(%arg0: i32, %arg1: i32) -> (i32, i32, i32) {
    %c0_i32 = arith.constant 0 : i32
    %c0_i32_0 = arith.constant 0 : i32
    return %arg1, %arg0, %c0_i32 : i32, i32, i32
  }
  func.func @transform_12(%arg0: i32, %arg1: i32) -> (i32, i32) {
    %c0_i32 = arith.constant 0 : i32
    %c0_i32_0 = arith.constant 0 : i32
    return %arg0, %c0_i32 : i32, i32
  }
}

</mosaic_0001>

<llo_original>
// kernel: tpu_custom_call.1
$region0: #{tpu_custom_call.1}
  #allocation0 [shape = 'u32[]', space=smem, size = 0x4, offset = 0x4, fixed_abs, tag = 'smem constant byte address 0x4 - core index']
  #allocation1 [shape = 'u32[144,128]{1,0:T(1,128)}', space=vmem, size = 0x12000, scoped, tag = 'internal scratch']
  #allocation2 [shape = 'f32[8,128]{1,0:T(8,128)}', space=vmem, size = 0x1000, scoped, tag = 'scratch operand']
  %s0 = inlined_call_operand.hbm [shape: f32[8,128], index: 0, kind: input, shape index: {}, may-alias: {0,12}]
  %s1 = inlined_call_operand.hbm [shape: f32[8,8,8], index: 1, kind: input, shape index: {}]
  %s2 = inlined_call_operand.hbm [shape: f32[8,8,384], index: 2, kind: input, shape index: {}]
  %s3 = inlined_call_operand.hbm [shape: f32[8,8,384], index: 3, kind: input, shape index: {}]
  %s4 = inlined_call_operand.hbm [shape: f32[8,8,128], index: 4, kind: input, shape index: {}]
  %s5 = inlined_call_operand.hbm [shape: f32[8,768], index: 5, kind: input, shape index: {}]
  %s6 = inlined_call_operand.vmem [shape: f32[1,768], index: 6, kind: input, shape index: {}]
  %s7 = inlined_call_operand.hbm [shape: f32[256,768], index: 7, kind: input, shape index: {}]
  %s8 = inlined_call_operand.vmem [shape: f32[1,768], index: 8, kind: input, shape index: {}]
  %s9 = inlined_call_operand.hbm [shape: f32[256,256], index: 9, kind: input, shape index: {}]
  %s10 = inlined_call_operand.vmem [shape: f32[1,256], index: 10, kind: input, shape index: {}]
  %s11 = inlined_call_operand.hbm [shape: f32[8,8,128], index: 11, kind: output, shape index: {0}]
  %s12 = inlined_call_operand.hbm [shape: f32[8,128], index: 12, kind: output, shape index: {1}, may-alias: {0,12}]
  %13 = xla_tuple %s11, %s12
  %s14 = sld [smem:[#allocation0]]
  $region125: #{tpu_custom_call.1} parent=0
    _
  %s16 = ssub.s32 1, %s14
  %s17 = scalar_select 0, %s16, %s14
  $region1: #{tpu_custom_call.1} parent=0
    #allocation3 [shape = 'u8[4096]{0}', space=vmem, size = 0x1000, scoped, tag = 'input window, operand 0, single buffered']
    #allocation4 [shape = 's32[2]{0}', space=sflag, size = 0x8, scoped, tag = 'scoped memory for tpu_custom_call.1']
    #allocation5 [shape = 's32[2]{0}', space=sflag, size = 0x8, scoped, tag = 'scoped memory for tpu_custom_call.1']
    #allocation6 [shape = 'u8[8192]{0}', space=vmem, size = 0x2000, scoped, tag = 'input window, operand 1']
    #allocation7 [shape = 's32[2]{0}', space=sflag, size = 0x8, scoped, tag = 'scoped memory for tpu_custom_call.1']
    #allocation8 [shape = 'u8[24576]{0}', space=vmem, size = 0x6000, scoped, tag = 'input window, operand 2']
    #allocation9 [shape = 'u8[24576]{0}', space=vmem, size = 0x6000, scoped, tag = 'input window, operand 3']
    #allocation10 [shape = 's32[2]{0}', space=sflag, size = 0x8, scoped, tag = 'scoped memory for tpu_custom_call.1']
    #allocation11 [shape = 'u8[8192]{0}', space=vmem, size = 0x2000, scoped, tag = 'input window, operand 4']
    #allocation12 [shape = 'u8[24576]{0}', space=vmem, size = 0x6000, scoped, tag = 'input window, operand 5, single buffered']
    #allocation13 [shape = 's32[1]{0}', space=sflag, size = 0x4, scoped, tag = 'scoped memory for tpu_custom_call.1']
    #allocation14 [shape = 'u8[786432]{0}', space=vmem, size = 0xc0000, scoped, tag = 'input window, operand 7, single buffered']
    #allocation15 [shape = 'u8[262144]{0}', space=vmem, size = 0x40000, scoped, tag = 'input window, operand 9, single buffered']
    #allocation16 [shape = 's32[1]{0}', space=sflag, size = 0x4, scoped, tag = 'scoped memory for tpu_custom_call.1']
    #allocation17 [shape = 'u8[8192]{0}', space=vmem, size = 0x2000, scoped, tag = 'output window, operand 0']
    #allocation18 [shape = 'u8[4096]{0}', space=vmem, size = 0x1000, scoped, tag = 'output window, operand 1, single buffered']
    #allocation19 [shape = 's32[1]{0}', space=sflag, size = 0x4, scoped, tag = 'scoped memory for tpu_custom_call.1']
    %18 = vsyncpa [#allocation4], 0
    %19 = vsyncpa [#allocation7], 0
    %s20 = scalar_lea.sflag [#allocation7], 1
    %21 = vsyncpa %s20, 0
    %22 = vsyncpa [#allocation10], 0
    %s23 = scalar_lea.sflag [#allocation10], 1
    %24 = vsyncpa %s23, 0
    %25 = vsyncpa [#allocation13], 0
    %26 = vsyncpa [#allocation16], 0
    %27 = vsyncpa [#allocation5], 0
    %s28 = scalar_lea.sflag [#allocation5], 1
    %29 = vsyncpa %s28, 0
    %30 = vsyncpa [#allocation19], 0
    loop: start=0, step=1, limit=10
    $region2: #{tpu_custom_call.1} parent=1 // loop_pre_header
      _
    $region3: #{tpu_custom_call.1} parent=1 // loop_header
      %s32 = sphi 0, %s36
      %p33 = scmp.ge.s32.totalorder %s32, 10
      %s39 = sphi 0, %s51
      %s40 = sphi 0, %s47
      %s41 = sphi 0, %s39
      %s42 = sphi 0, %s40
      %s43 = sphi 0, %s41
      %s44 = sphi 0, %s42
      %s54 = sphi 0, %s56
      %s57 = sphi 0, %s54
      %s58 = sphi 0, %s57
      %s74 = sphi 0, %s58
      %s82 = sphi 0, %s84
      %s85 = sphi 0, %s82
      %s86 = sphi 0, %s85
      %s102 = sphi 0, %s86
      %s110 = sphi 0, %s112
      %s113 = sphi 0, %s110
      %s114 = sphi 0, %s113
      %s130 = sphi 0, %s114
      %s138 = sphi 0, %s140
      %s141 = sphi 0, %s138
      %s142 = sphi 0, %s141
      %s158 = sphi 0, %s142
      %s166 = sphi 0, %s168
      %s169 = sphi 0, %s166
      %s170 = sphi 0, %s169
      %s186 = sphi 0, %s170
      %s190 = sphi 0, %s190
      %s192 = sphi 0, %s190
      %s193 = sphi 0, %s192
      %s207 = sphi 0, %s193
      %s211 = sphi 0, %s211
      %s213 = sphi 0, %s211
      %s214 = sphi 0, %s213
      %s228 = sphi 0, %s214
      %s232 = sphi 0, %s232
      %s234 = sphi 0, %s232
      %s235 = sphi 0, %s234
      %s249 = sphi 0, %s235
      %s253 = sphi 0, %s253
      %s255 = sphi 0, %s253
      %s256 = sphi 0, %s255
      %s270 = sphi 0, %s256
      %s274 = sphi 0, %s274
      %s276 = sphi 0, %s274
      %s277 = sphi 0, %s276
      %s291 = sphi 0, %s277
      %s295 = sphi 0, %s295
      %s297 = sphi 0, %s295
      %s298 = sphi 0, %s297
      %s312 = sphi 0, %s298
      %s320 = sphi 0, %s322
      %s323 = sphi 0, %s320
      %s324 = sphi 0, %s323
      %s340 = sphi 0, %s324
      %s346 = sphi 0, %s348
      %s349 = sphi 0, %s346
      %s350 = sphi 0, %s349
      %s366 = sphi 0, %s350
    $region4: #{tpu_custom_call.1} parent=1 // loop_header_branch
      %35 = sbr.rel (%p33) target = $region8
    $region5: #{tpu_custom_call.1} parent=1 // loop_body
      %s37 = ssub.s32 %s32, 1
      %s38 = ssub.s32 %s32, 2
      %s45 = sadd.s32 1, %s40
      %p46 = scmp.ge.s32.totalorder %s45, 8
      %s47 = scalar_select %p46, 0, %s45
      %s48 = sadd.s32 1, %s39
      %s49 = scalar_select %p46, %s48, %s39
      %p50 = scmp.ge.s32.totalorder %s49, 1
      %s51 = scalar_select %p50, 0, %s49
      %s52 = ssub.s32 %s39, %s51
      %p53 = scmp.eq.s32.totalorder %s52, 0
      %s55 = sadd.s32 %s54, 1
      %s56 = scalar_select %p53, %s54, %s55
      %p59 = pneg %p53
      %p60 = scmp.eq.s32.totalorder %s32, 7
      %p61 = por %p59, %p60
      %p62 = scmp.ne.s32.totalorder %s54, %s57
      %p63 = scmp.eq.s32.totalorder %s32, 0
      %p64 = por %p62, %p63
      %p65 = scmp.ne.s32.totalorder %s54, %s57
      %p66 = scmp.eq.s32.totalorder %s37, 7
      %p67 = por %p65, %p66
      %p68 = scmp.ne.s32.totalorder %s57, %s58
      %p69 = scmp.eq.s32.totalorder %s37, 0
      %p70 = por %p68, %p69
      %p71 = scmp.ne.s32.totalorder %s57, %s58
      %p72 = scmp.eq.s32.totalorder %s38, 7
      %p73 = por %p71, %p72
      %p75 = scmp.ne.s32.totalorder %s58, %s74
      %p76 = scmp.eq.s32.totalorder %s38, 0
      %p77 = por %p75, %p76
      %s78 = ssub.s32 %s40, %s47
      %s79 = ssub.s32 %s39, %s51
      %s80 = sor.u32 %s78, %s79
      %p81 = scmp.eq.s32.totalorder %s80, 0
      %s83 = sadd.s32 %s82, 1
      %s84 = scalar_select %p81, %s82, %s83
      %p87 = pneg %p81
      %p88 = scmp.eq.s32.totalorder %s32, 7
      %p89 = por %p87, %p88
      %p90 = scmp.ne.s32.totalorder %s82, %s85
      %p91 = scmp.eq.s32.totalorder %s32, 0
      %p92 = por %p90, %p91
      %p93 = scmp.ne.s32.totalorder %s82, %s85
      %p94 = scmp.eq.s32.totalorder %s37, 7
      %p95 = por %p93, %p94
      %p96 = scmp.ne.s32.totalorder %s85, %s86
      %p97 = scmp.eq.s32.totalorder %s37, 0
      %p98 = por %p96, %p97
      %p99 = scmp.ne.s32.totalorder %s85, %s86
      %p100 = scmp.eq.s32.totalorder %s38, 7
      %p101 = por %p99, %p100
      %p103 = scmp.ne.s32.totalorder %s86, %s102
      %p104 = scmp.eq.s32.totalorder %s38, 0
      %p105 = por %p103, %p104
      %s106 = ssub.s32 %s40, %s47
      %s107 = ssub.s32 %s39, %s51
      %s108 = sor.u32 %s106, %s107
      %p109 = scmp.eq.s32.totalorder %s108, 0
      %s111 = sadd.s32 %s110, 1
      %s112 = scalar_select %p109, %s110, %s111
      %p115 = pneg %p109
      %p116 = scmp.eq.s32.totalorder %s32, 7
      %p117 = por %p115, %p116
      %p118 = scmp.ne.s32.totalorder %s110, %s113
      %p119 = scmp.eq.s32.totalorder %s32, 0
      %p120 = por %p118, %p119
      %p121 = scmp.ne.s32.totalorder %s110, %s113
      %p122 = scmp.eq.s32.totalorder %s37, 7
      %p123 = por %p121, %p122
      %p124 = scmp.ne.s32.totalorder %s113, %s114
      %p125 = scmp.eq.s32.totalorder %s37, 0
      %p126 = por %p124, %p125
      %p127 = scmp.ne.s32.totalorder %s113, %s114
      %p128 = scmp.eq.s32.totalorder %s38, 7
      %p129 = por %p127, %p128
      %p131 = scmp.ne.s32.totalorder %s114, %s130
      %p132 = scmp.eq.s32.totalorder %s38, 0
      %p133 = por %p131, %p132
      %s134 = ssub.s32 %s40, %s47
      %s135 = ssub.s32 %s39, %s51
      %s136 = sor.u32 %s134, %s135
      %p137 = scmp.eq.s32.totalorder %s136, 0
      %s139 = sadd.s32 %s138, 1
      %s140 = scalar_select %p137, %s138, %s139
      %p143 = pneg %p137
      %p144 = scmp.eq.s32.totalorder %s32, 7
      %p145 = por %p143, %p144
      %p146 = scmp.ne.s32.totalorder %s138, %s141
      %p147 = scmp.eq.s32.totalorder %s32, 0
      %p148 = por %p146, %p147
      %p149 = scmp.ne.s32.totalorder %s138, %s141
      %p150 = scmp.eq.s32.totalorder %s37, 7
      %p151 = por %p149, %p150
      %p152 = scmp.ne.s32.totalorder %s141, %s142
      %p153 = scmp.eq.s32.totalorder %s37, 0
      %p154 = por %p152, %p153
      %p155 = scmp.ne.s32.totalorder %s141, %s142
      %p156 = scmp.eq.s32.totalorder %s38, 7
      %p157 = por %p155, %p156
      %p159 = scmp.ne.s32.totalorder %s142, %s158
      %p160 = scmp.eq.s32.totalorder %s38, 0
      %p161 = por %p159, %p160
      %s162 = ssub.s32 %s40, %s47
      %s163 = ssub.s32 %s39, %s51
      %s164 = sor.u32 %s162, %s163
      %p165 = scmp.eq.s32.totalorder %s164, 0
      %s167 = sadd.s32 %s166, 1
      %s168 = scalar_select %p165, %s166, %s167
      %p171 = pneg %p165
      %p172 = scmp.eq.s32.totalorder %s32, 7
      %p173 = por %p171, %p172
      %p174 = scmp.ne.s32.totalorder %s166, %s169
      %p175 = scmp.eq.s32.totalorder %s32, 0
      %p176 = por %p174, %p175
      %p177 = scmp.ne.s32.totalorder %s166, %s169
      %p178 = scmp.eq.s32.totalorder %s37, 7
      %p179 = por %p177, %p178
      %p180 = scmp.ne.s32.totalorder %s169, %s170
      %p181 = scmp.eq.s32.totalorder %s37, 0
      %p182 = por %p180, %p181
      %p183 = scmp.ne.s32.totalorder %s169, %s170
      %p184 = scmp.eq.s32.totalorder %s38, 7
      %p185 = por %p183, %p184
      %p187 = scmp.ne.s32.totalorder %s170, %s186
      %p188 = scmp.eq.s32.totalorder %s38, 0
      %p189 = por %p187, %p188
      %s191 = sadd.s32 %s190, 1
      %p194 = scmp.eq.s32.totalorder %s32, 7
      %p195 = scmp.ne.s32.totalorder %s190, %s192
      %p196 = scmp.eq.s32.totalorder %s32, 0
      %p197 = por %p195, %p196
      %p198 = scmp.ne.s32.totalorder %s190, %s192
      %p199 = scmp.eq.s32.totalorder %s37, 7
      %p200 = por %p198, %p199
      %p201 = scmp.ne.s32.totalorder %s192, %s193
      %p202 = scmp.eq.s32.totalorder %s37, 0
      %p203 = por %p201, %p202
      %p204 = scmp.ne.s32.totalorder %s192, %s193
      %p205 = scmp.eq.s32.totalorder %s38, 7
      %p206 = por %p204, %p205
      %p208 = scmp.ne.s32.totalorder %s193, %s207
      %p209 = scmp.eq.s32.totalorder %s38, 0
      %p210 = por %p208, %p209
      %s212 = sadd.s32 %s211, 1
      %p215 = scmp.eq.s32.totalorder %s32, 7
      %p216 = scmp.ne.s32.totalorder %s211, %s213
      %p217 = scmp.eq.s32.totalorder %s32, 0
      %p218 = por %p216, %p217
      %p219 = scmp.ne.s32.totalorder %s211, %s213
      %p220 = scmp.eq.s32.totalorder %s37, 7
      %p221 = por %p219, %p220
      %p222 = scmp.ne.s32.totalorder %s213, %s214
      %p223 = scmp.eq.s32.totalorder %s37, 0
      %p224 = por %p222, %p223
      %p225 = scmp.ne.s32.totalorder %s213, %s214
      %p226 = scmp.eq.s32.totalorder %s38, 7
      %p227 = por %p225, %p226
      %p229 = scmp.ne.s32.totalorder %s214, %s228
      %p230 = scmp.eq.s32.totalorder %s38, 0
      %p231 = por %p229, %p230
      %s233 = sadd.s32 %s232, 1
      %p236 = scmp.eq.s32.totalorder %s32, 7
      %p237 = scmp.ne.s32.totalorder %s232, %s234
      %p238 = scmp.eq.s32.totalorder %s32, 0
      %p239 = por %p237, %p238
      %p240 = scmp.ne.s32.totalorder %s232, %s234
      %p241 = scmp.eq.s32.totalorder %s37, 7
      %p242 = por %p240, %p241
      %p243 = scmp.ne.s32.totalorder %s234, %s235
      %p244 = scmp.eq.s32.totalorder %s37, 0
      %p245 = por %p243, %p244
      %p246 = scmp.ne.s32.totalorder %s234, %s235
      %p247 = scmp.eq.s32.totalorder %s38, 7
      %p248 = por %p246, %p247
      %p250 = scmp.ne.s32.totalorder %s235, %s249
      %p251 = scmp.eq.s32.totalorder %s38, 0
      %p252 = por %p250, %p251
      %s254 = sadd.s32 %s253, 1
      %p257 = scmp.eq.s32.totalorder %s32, 7
      %p258 = scmp.ne.s32.totalorder %s253, %s255
      %p259 = scmp.eq.s32.totalorder %s32, 0
      %p260 = por %p258, %p259
      %p261 = scmp.ne.s32.totalorder %s253, %s255
      %p262 = scmp.eq.s32.totalorder %s37, 7
      %p263 = por %p261, %p262
      %p264 = scmp.ne.s32.totalorder %s255, %s256
      %p265 = scmp.eq.s32.totalorder %s37, 0
      %p266 = por %p264, %p265
      %p267 = scmp.ne.s32.totalorder %s255, %s256
      %p268 = scmp.eq.s32.totalorder %s38, 7
      %p269 = por %p267, %p268
      %p271 = scmp.ne.s32.totalorder %s256, %s270
      %p272 = scmp.eq.s32.totalorder %s38, 0
      %p273 = por %p271, %p272
      %s275 = sadd.s32 %s274, 1
      %p278 = scmp.eq.s32.totalorder %s32, 7
      %p279 = scmp.ne.s32.totalorder %s274, %s276
      %p280 = scmp.eq.s32.totalorder %s32, 0
      %p281 = por %p279, %p280
      %p282 = scmp.ne.s32.totalorder %s274, %s276
      %p283 = scmp.eq.s32.totalorder %s37, 7
      %p284 = por %p282, %p283
      %p285 = scmp.ne.s32.totalorder %s276, %s277
      %p286 = scmp.eq.s32.totalorder %s37, 0
      %p287 = por %p285, %p286
      %p288 = scmp.ne.s32.totalorder %s276, %s277
      %p289 = scmp.eq.s32.totalorder %s38, 7
      %p290 = por %p288, %p289
      %p292 = scmp.ne.s32.totalorder %s277, %s291
      %p293 = scmp.eq.s32.totalorder %s38, 0
      %p294 = por %p292, %p293
      %s296 = sadd.s32 %s295, 1
      %p299 = scmp.eq.s32.totalorder %s32, 7
      %p300 = scmp.ne.s32.totalorder %s295, %s297
      %p301 = scmp.eq.s32.totalorder %s32, 0
      %p302 = por %p300, %p301
      %p303 = scmp.ne.s32.totalorder %s295, %s297
      %p304 = scmp.eq.s32.totalorder %s37, 7
      %p305 = por %p303, %p304
      %p306 = scmp.ne.s32.totalorder %s297, %s298
      %p307 = scmp.eq.s32.totalorder %s37, 0
      %p308 = por %p306, %p307
      %p309 = scmp.ne.s32.totalorder %s297, %s298
      %p310 = scmp.eq.s32.totalorder %s38, 7
      %p311 = por %p309, %p310
      %p313 = scmp.ne.s32.totalorder %s298, %s312
      %p314 = scmp.eq.s32.totalorder %s38, 0
      %p315 = por %p313, %p314
      %s316 = ssub.s32 %s40, %s47
      %s317 = ssub.s32 %s39, %s51
      %s318 = sor.u32 %s316, %s317
      %p319 = scmp.eq.s32.totalorder %s318, 0
      %s321 = sadd.s32 %s320, 1
      %s322 = scalar_select %p319, %s320, %s321
      %p325 = pneg %p319
      %p326 = scmp.eq.s32.totalorder %s32, 7
      %p327 = por %p325, %p326
      %p328 = scmp.ne.s32.totalorder %s320, %s323
      %p329 = scmp.eq.s32.totalorder %s32, 0
      %p330 = por %p328, %p329
      %p331 = scmp.ne.s32.totalorder %s320, %s323
      %p332 = scmp.eq.s32.totalorder %s37, 7
      %p333 = por %p331, %p332
      %p334 = scmp.ne.s32.totalorder %s323, %s324
      %p335 = scmp.eq.s32.totalorder %s37, 0
      %p336 = por %p334, %p335
      %p337 = scmp.ne.s32.totalorder %s323, %s324
      %p338 = scmp.eq.s32.totalorder %s38, 7
      %p339 = por %p337, %p338
      %p341 = scmp.ne.s32.totalorder %s324, %s340
      %p342 = scmp.eq.s32.totalorder %s38, 0
      %p343 = por %p341, %p342
      %s344 = ssub.s32 %s39, %s51
      %p345 = scmp.eq.s32.totalorder %s344, 0
      %s347 = sadd.s32 %s346, 1
      %s348 = scalar_select %p345, %s346, %s347
      %p351 = pneg %p345
      %p352 = scmp.eq.s32.totalorder %s32, 7
      %p353 = por %p351, %p352
      %p354 = scmp.ne.s32.totalorder %s346, %s349
      %p355 = scmp.eq.s32.totalorder %s32, 0
      %p356 = por %p354, %p355
      %p357 = scmp.ne.s32.totalorder %s346, %s349
      %p358 = scmp.eq.s32.totalorder %s37, 7
      %p359 = por %p357, %p358
      %p360 = scmp.ne.s32.totalorder %s349, %s350
      %p361 = scmp.eq.s32.totalorder %s37, 0
      %p362 = por %p360, %p361
      %p363 = scmp.ne.s32.totalorder %s349, %s350
      %p364 = scmp.eq.s32.totalorder %s38, 7
      %p365 = por %p363, %p364
      %p367 = scmp.ne.s32.totalorder %s350, %s366
      %p368 = scmp.eq.s32.totalorder %s38, 0
      %p369 = por %p367, %p368
      %p370 = scmp.le.s32.totalorder 1, %s32
      %p371 = scmp.lt.s32.totalorder %s32, 9
      %p372 = pnand %p370, %p371
      %p373 = pneg %p372
      // Predicated region
      $region9: #{tpu_custom_call.1} parent=5 // pred_check
        _
      $region10: #{tpu_custom_call.1} parent=5 // pred_check_branch
        %375 = sbr.rel (%p372) target = $region12
      $region11: #{tpu_custom_call.1} parent=5 // pred_region
        %s376 = ssub.s32 %s32, 1
        // Predicated region
        $region13: #{tpu_custom_call.1} parent=11 // pred_check
          %p377 = pneg %p70
        $region14: #{tpu_custom_call.1} parent=11 // pred_check_branch
          %379 = sbr.rel (%p377) target = $region16
        $region15: #{tpu_custom_call.1} parent=11 // pred_region
          %s381 = ssub.s32 128, 128
          %382 = vsyncadd [#allocation4], %s381
          %s383 = smul.addr %s41, 128
          %s384 = scalar_lea.hbm %s0, %s383
          %s386 = sshll.u32 [#allocation3], 4
          %s387 = int_to_ptr.vmem [resolvable:$true] %s386
          %389 = dma.hbm_to_vmem [thread:$0]  %s384, 128, %s387, [#allocation4]
        $region16: #{tpu_custom_call.1} parent=11 // pred_fallthru
          _
        // Predicated region
        $region17: #{tpu_custom_call.1} parent=11 // pred_check
          %p390 = pneg %p203
        $region18: #{tpu_custom_call.1} parent=11 // pred_check_branch
          %392 = sbr.rel (%p390) target = $region20
        $region19: #{tpu_custom_call.1} parent=11 // pred_region
          %s394 = ssub.s32 768, 768
          %395 = vsyncadd [#allocation13], %s394
          %s397 = sshll.u32 [#allocation12], 4
          %s398 = int_to_ptr.vmem [resolvable:$true] %s397
          %400 = dma.hbm_to_vmem [thread:$0]  %s5, 768, %s398, [#allocation13]
        $region20: #{tpu_custom_call.1} parent=11 // pred_fallthru
          _
        // Predicated region
        $region21: #{tpu_custom_call.1} parent=11 // pred_check
          %p401 = pneg %p224
        $region22: #{tpu_custom_call.1} parent=11 // pred_check_branch
          %403 = sbr.rel (%p401) target = $region24
        $region23: #{tpu_custom_call.1} parent=11 // pred_region
          _
        $region24: #{tpu_custom_call.1} parent=11 // pred_fallthru
          _
        // Predicated region
        $region25: #{tpu_custom_call.1} parent=11 // pred_check
          %p404 = pneg %p245
        $region26: #{tpu_custom_call.1} parent=11 // pred_check_branch
          %406 = sbr.rel (%p404) target = $region28
        $region27: #{tpu_custom_call.1} parent=11 // pred_region
          %s408 = ssub.s32 24576, 24576
          %409 = vsyncadd [#allocation13], %s408
          %s410 = sshll.u32 [#allocation14], 4
          %s411 = int_to_ptr.vmem [resolvable:$true] %s410
          %416 = dma.hbm_to_vmem [thread:$0]  %s7, 24576, %s411, [#allocation13], 768, 768, 48
        $region28: #{tpu_custom_call.1} parent=11 // pred_fallthru
          _
        // Predicated region
        $region29: #{tpu_custom_call.1} parent=11 // pred_check
          %p417 = pneg %p266
        $region30: #{tpu_custom_call.1} parent=11 // pred_check_branch
          %419 = sbr.rel (%p417) target = $region32
        $region31: #{tpu_custom_call.1} parent=11 // pred_region
          _
        $region32: #{tpu_custom_call.1} parent=11 // pred_fallthru
          _
        // Predicated region
        $region33: #{tpu_custom_call.1} parent=11 // pred_check
          %p420 = pneg %p287
        $region34: #{tpu_custom_call.1} parent=11 // pred_check_branch
          %422 = sbr.rel (%p420) target = $region36
        $region35: #{tpu_custom_call.1} parent=11 // pred_region
          %s424 = ssub.s32 8192, 8192
          %425 = vsyncadd [#allocation16], %s424
          %s426 = sshll.u32 [#allocation15], 4
          %s427 = int_to_ptr.vmem [resolvable:$true] %s426
          %432 = dma.hbm_to_vmem [thread:$0]  %s9, 8192, %s427, [#allocation16], 256, 256, 16
        $region36: #{tpu_custom_call.1} parent=11 // pred_fallthru
          _
        // Predicated region
        $region37: #{tpu_custom_call.1} parent=11 // pred_check
          %p433 = pneg %p308
        $region38: #{tpu_custom_call.1} parent=11 // pred_check_branch
          %435 = sbr.rel (%p433) target = $region40
        $region39: #{tpu_custom_call.1} parent=11 // pred_region
          _
        $region40: #{tpu_custom_call.1} parent=11 // pred_fallthru
          _
      $region12: #{tpu_custom_call.1} parent=5 // pred_fallthru
        _
      %p436 = scmp.lt.s32.totalorder %s32, 8
      // Predicated region
      $region41: #{tpu_custom_call.1} parent=5 // pred_check
        %p437 = pneg %p436
      $region42: #{tpu_custom_call.1} parent=5 // pred_check_branch
        %439 = sbr.rel (%p437) target = $region44
      $region43: #{tpu_custom_call.1} parent=5 // pred_region
        // Predicated region
        $region45: #{tpu_custom_call.1} parent=43 // pred_check
          %p440 = pneg %p92
        $region46: #{tpu_custom_call.1} parent=43 // pred_check_branch
          %442 = sbr.rel (%p440) target = $region48
        $region47: #{tpu_custom_call.1} parent=43 // pred_region
          %s443 = sand.u32 %s32, 1
          %s444 = scalar_lea.sflag [#allocation7], %s443
          %s445 = sand.u32 %s82, 1
          %s446 = smul.addr %s445, 8
          %s447 = scalar_lea.vmem [#allocation6], %s446
          %s449 = ssub.s32 128, 128
          %450 = vsyncadd %s444, %s449
          %s451 = sadd.s32 %s39, %s40
          %s452 = smul.addr %s451, 128
          %s453 = scalar_lea.hbm %s1, %s452
          %s455 = sshll.u32 %s447, 4
          %s456 = int_to_ptr.vmem [resolvable:$true] %s455
          %458 = dma.hbm_to_vmem [thread:$0]  %s453, 128, %s456, %s444
        $region48: #{tpu_custom_call.1} parent=43 // pred_fallthru
          _
        // Predicated region
        $region49: #{tpu_custom_call.1} parent=43 // pred_check
          %p459 = pneg %p120
        $region50: #{tpu_custom_call.1} parent=43 // pred_check_branch
          %461 = sbr.rel (%p459) target = $region52
        $region51: #{tpu_custom_call.1} parent=43 // pred_region
          %s462 = sand.u32 %s32, 1
          %s463 = scalar_lea.sflag [#allocation7], %s462
          %s464 = sand.u32 %s110, 1
          %s465 = smul.addr %s464, 24
          %s466 = scalar_lea.vmem [#allocation8], %s465
          %s468 = ssub.s32 384, 384
          %469 = vsyncadd %s463, %s468
          %s470 = smul.addr %s39, 3
          %s471 = smul.addr %s40, 3
          %s472 = sadd.s32 %s470, %s471
          %s473 = smul.addr %s472, 128
          %s474 = scalar_lea.hbm %s2, %s473
          %s476 = sshll.u32 %s466, 4
          %s477 = int_to_ptr.vmem [resolvable:$true] %s476
          %479 = dma.hbm_to_vmem [thread:$0]  %s474, 384, %s477, %s463
        $region52: #{tpu_custom_call.1} parent=43 // pred_fallthru
          _
        // Predicated region
        $region53: #{tpu_custom_call.1} parent=43 // pred_check
          %p480 = pneg %p148
        $region54: #{tpu_custom_call.1} parent=43 // pred_check_branch
          %482 = sbr.rel (%p480) target = $region56
        $region55: #{tpu_custom_call.1} parent=43 // pred_region
          %s483 = sand.u32 %s32, 1
          %s484 = scalar_lea.sflag [#allocation10], %s483
          %s485 = sand.u32 %s138, 1
          %s486 = smul.addr %s485, 24
          %s487 = scalar_lea.vmem [#allocation9], %s486
          %s489 = ssub.s32 384, 384
          %490 = vsyncadd %s484, %s489
          %s491 = smul.addr %s39, 3
          %s492 = smul.addr %s40, 3
          %s493 = sadd.s32 %s491, %s492
          %s494 = smul.addr %s493, 128
          %s495 = scalar_lea.hbm %s3, %s494
          %s497 = sshll.u32 %s487, 4
          %s498 = int_to_ptr.vmem [resolvable:$true] %s497
          %500 = dma.hbm_to_vmem [thread:$0]  %s495, 384, %s498, %s484
        $region56: #{tpu_custom_call.1} parent=43 // pred_fallthru
          _
        // Predicated region
        $region57: #{tpu_custom_call.1} parent=43 // pred_check
          %p501 = pneg %p176
        $region58: #{tpu_custom_call.1} parent=43 // pred_check_branch
          %503 = sbr.rel (%p501) target = $region60
        $region59: #{tpu_custom_call.1} parent=43 // pred_region
          %s504 = sand.u32 %s32, 1
          %s505 = scalar_lea.sflag [#allocation10], %s504
          %s506 = sand.u32 %s166, 1
          %s507 = smul.addr %s506, 8
          %s508 = scalar_lea.vmem [#allocation11], %s507
          %s510 = ssub.s32 128, 128
          %511 = vsyncadd %s505, %s510
          %s512 = sadd.s32 %s39, %s40
          %s513 = smul.addr %s512, 128
          %s514 = scalar_lea.hbm %s4, %s513
          %s516 = sshll.u32 %s508, 4
          %s517 = int_to_ptr.vmem [resolvable:$true] %s516
          %519 = dma.hbm_to_vmem [thread:$0]  %s514, 128, %s517, %s505
        $region60: #{tpu_custom_call.1} parent=43 // pred_fallthru
          _
      $region44: #{tpu_custom_call.1} parent=5 // pred_fallthru
        _
      %p520 = scmp.le.s32.totalorder 1, %s32
      %p521 = scmp.lt.s32.totalorder %s32, 9
      %p522 = pnand %p520, %p521
      %p523 = pneg %p522
      // Predicated region
      $region61: #{tpu_custom_call.1} parent=5 // pred_check
        _
      $region62: #{tpu_custom_call.1} parent=5 // pred_check_branch
        %525 = sbr.rel (%p522) target = $region64
      $region63: #{tpu_custom_call.1} parent=5 // pred_region
        %s526 = ssub.s32 %s32, 1
        // Predicated region
        $region65: #{tpu_custom_call.1} parent=63 // pred_check
          %p527 = pneg %p70
        $region66: #{tpu_custom_call.1} parent=63 // pred_check_branch
          %529 = sbr.rel (%p527) target = $region68
        $region67: #{tpu_custom_call.1} parent=63 // pred_region
          %530 = dma.done [#allocation4], 128
        $region68: #{tpu_custom_call.1} parent=63 // pred_fallthru
          _
        %s531 = sand.u32 %s37, 1
        %s532 = scalar_lea.sflag [#allocation7], %s531
        %s533 = sand.u32 %s85, 1
        %s534 = smul.addr %s533, 8
        %s535 = scalar_lea.vmem [#allocation6], %s534
        // Predicated region
        $region69: #{tpu_custom_call.1} parent=63 // pred_check
          %p536 = pneg %p98
        $region70: #{tpu_custom_call.1} parent=63 // pred_check_branch
          %538 = sbr.rel (%p536) target = $region72
        $region71: #{tpu_custom_call.1} parent=63 // pred_region
          %539 = dma.done %s532, 128
        $region72: #{tpu_custom_call.1} parent=63 // pred_fallthru
          _
        %s540 = sand.u32 %s37, 1
        %s541 = scalar_lea.sflag [#allocation7], %s540
        %s542 = sand.u32 %s113, 1
        %s543 = smul.addr %s542, 24
        %s544 = scalar_lea.vmem [#allocation8], %s543
        // Predicated region
        $region73: #{tpu_custom_call.1} parent=63 // pred_check
          %p545 = pneg %p126
        $region74: #{tpu_custom_call.1} parent=63 // pred_check_branch
          %547 = sbr.rel (%p545) target = $region76
        $region75: #{tpu_custom_call.1} parent=63 // pred_region
          %548 = dma.done %s541, 384
        $region76: #{tpu_custom_call.1} parent=63 // pred_fallthru
          _
        %s549 = sand.u32 %s37, 1
        %s550 = scalar_lea.sflag [#allocation10], %s549
        %s551 = sand.u32 %s141, 1
        %s552 = smul.addr %s551, 24
        %s553 = scalar_lea.vmem [#allocation9], %s552
        // Predicated region
        $region77: #{tpu_custom_call.1} parent=63 // pred_check
          %p554 = pneg %p154
        $region78: #{tpu_custom_call.1} parent=63 // pred_check_branch
          %556 = sbr.rel (%p554) target = $region80
        $region79: #{tpu_custom_call.1} parent=63 // pred_region
          %557 = dma.done %s550, 384
        $region80: #{tpu_custom_call.1} parent=63 // pred_fallthru
          _
        %s558 = sand.u32 %s37, 1
        %s559 = scalar_lea.sflag [#allocation10], %s558
        %s560 = sand.u32 %s169, 1
        %s561 = smul.addr %s560, 8
        %s562 = scalar_lea.vmem [#allocation11], %s561
        // Predicated region
        $region81: #{tpu_custom_call.1} parent=63 // pred_check
          %p563 = pneg %p182
        $region82: #{tpu_custom_call.1} parent=63 // pred_check_branch
          %565 = sbr.rel (%p563) target = $region84
        $region83: #{tpu_custom_call.1} parent=63 // pred_region
          %566 = dma.done %s559, 128
        $region84: #{tpu_custom_call.1} parent=63 // pred_fallthru
          _
        // Predicated region
        $region85: #{tpu_custom_call.1} parent=63 // pred_check
          %p567 = pneg %p203
        $region86: #{tpu_custom_call.1} parent=63 // pred_check_branch
          %569 = sbr.rel (%p567) target = $region88
        $region87: #{tpu_custom_call.1} parent=63 // pred_region
          %570 = dma.done [#allocation13], 768
        $region88: #{tpu_custom_call.1} parent=63 // pred_fallthru
          _
        // Predicated region
        $region89: #{tpu_custom_call.1} parent=63 // pred_check
          %p571 = pneg %p245
        $region90: #{tpu_custom_call.1} parent=63 // pred_check_branch
          %573 = sbr.rel (%p571) target = $region92
        $region91: #{tpu_custom_call.1} parent=63 // pred_region
          %574 = dma.done [#allocation13], 24576
        $region92: #{tpu_custom_call.1} parent=63 // pred_fallthru
          _
        // Predicated region
        $region93: #{tpu_custom_call.1} parent=63 // pred_check
          %p575 = pneg %p287
        $region94: #{tpu_custom_call.1} parent=63 // pred_check_branch
          %577 = sbr.rel (%p575) target = $region96
        $region95: #{tpu_custom_call.1} parent=63 // pred_region
          %578 = dma.done [#allocation16], 8192
        $region96: #{tpu_custom_call.1} parent=63 // pred_fallthru
          _
        %p579 = pneg %p70
        %p580 = pneg %p67
        %s581 = sand.u32 %s37, 1
        %s582 = scalar_lea.sflag [#allocation7], %s581
        %s583 = sand.u32 %s85, 1
        %s584 = smul.addr %s583, 8
        %s585 = scalar_lea.vmem [#allocation6], %s584
        %p586 = pneg %p98
        %p587 = pneg %p95
        %s588 = sand.u32 %s37, 1
        %s589 = scalar_lea.sflag [#allocation7], %s588
        %s590 = sand.u32 %s113, 1
        %s591 = smul.addr %s590, 24
        %s592 = scalar_lea.vmem [#allocation8], %s591
        %p593 = pneg %p126
        %p594 = pneg %p123
        %s595 = sand.u32 %s37, 1
        %s596 = scalar_lea.sflag [#allocation10], %s595
        %s597 = sand.u32 %s141, 1
        %s598 = smul.addr %s597, 24
        %s599 = scalar_lea.vmem [#allocation9], %s598
        %p600 = pneg %p154
        %p601 = pneg %p151
        %s602 = sand.u32 %s37, 1
        %s603 = scalar_lea.sflag [#allocation10], %s602
        %s604 = sand.u32 %s169, 1
        %s605 = smul.addr %s604, 8
        %s606 = scalar_lea.vmem [#allocation11], %s605
        %p607 = pneg %p182
        %p608 = pneg %p179
        %p609 = pneg %p203
        %p610 = pneg %p200
        %p611 = pneg %p224
        %p612 = pneg %p221
        %p613 = pneg %p245
        %p614 = pneg %p242
        %p615 = pneg %p266
        %p616 = pneg %p263
        %p617 = pneg %p287
        %p618 = pneg %p284
        %p619 = pneg %p308
        %p620 = pneg %p305
        %p621 = pneg %p336
        %p622 = pneg %p333
        %s623 = sand.u32 %s323, 1
        %s624 = scalar_lea.sflag [#allocation5], %s623
        %s625 = sand.u32 %s323, 1
        %s626 = smul.addr %s625, 8
        %s627 = scalar_lea.vmem [#allocation17], %s626
        %p628 = pneg %p362
        %p629 = pneg %p359
        %p630 = scmp.eq.s32.totalorder %s42, 0
        // Predicated region
        $region97: #{tpu_custom_call.1} parent=63 // pred_check
          %p631 = pneg %p630
        $region98: #{tpu_custom_call.1} parent=63 // pred_check_branch
          %633 = sbr.rel (%p631) target = $region100
        $region99: #{tpu_custom_call.1} parent=63 // pred_region
          %v634 = vld [vmem:[#allocation3] sm:$0xff]
          %635 = vst [vmem:[#allocation2] sm:$0xff] %v634
        $region100: #{tpu_custom_call.1} parent=63 // pred_fallthru
          _
        %v636 = vld [vmem:[#allocation2] sm:$0xff]
        %v637 = vld [vmem:[%s535] sm:$0xff]
        %v638 = vld [vmem:[#allocation12] sm:$0xff]
        %v639 = vld [vmem:[#allocation12 + $0x8] sm:$0xff]
        %v640 = vld [vmem:[#allocation12 + $0x10] sm:$0xff]
        %v641 = vld [vmem:[#allocation12 + $0x18] sm:$0xff]
        %v642 = vld [vmem:[#allocation12 + $0x20] sm:$0xff]
        %v643 = vld [vmem:[#allocation12 + $0x28] sm:$0xff]
        %v644 = vld [vmem:[%s6] sm:$0x3f]
        %v646 = vlaneseq
        %v647 = vshrl.u32 %v646, 7
        %v648 = vsub.s32 0, %v647
        %v649 = vrot.slane %v644, %v648
        %v650 = vlaneseq
        %v651 = vshrl.u32 %v650, 7
        %v652 = vsub.s32 1, %v651
        %v653 = vrot.slane %v644, %v652
        %v654 = vlaneseq
        %v655 = vshrl.u32 %v654, 7
        %v656 = vsub.s32 2, %v655
        %v657 = vrot.slane %v644, %v656
        %v658 = vlaneseq
        %v659 = vshrl.u32 %v658, 7
        %v660 = vsub.s32 3, %v659
        %v661 = vrot.slane %v644, %v660
        %v662 = vlaneseq
        %v663 = vshrl.u32 %v662, 7
        %v664 = vsub.s32 4, %v663
        %v665 = vrot.slane %v644, %v664
        %v666 = vlaneseq
        %v667 = vshrl.u32 %v666, 7
        %v668 = vsub.s32 5, %v667
        %v669 = vrot.slane %v644, %v668
        %vm676 = vcmask 64512
        %v678 = vsel %vm676, %v637, 0
        %680 = vmatprep.subr.mxu0 0.0
        %681 = vmatpush1.msra.mxu0 0.0
        %682 = vmatprep.subr.mxu0 0.0
        %683 = vmatpush1.msra.mxu0 0.0
        %684 = vmatprep.subr.mxu0 0.0
        %685 = vmatpush1.msra.mxu0 0.0
        %686 = vmatprep.subr.mxu0 0.0
        %687 = vmatpush1.msra.mxu0 0.0
        %688 = vmatprep.subr.mxu0 0.0
        %689 = vmatpush1.msra.mxu0 0.0
        %690 = vmatprep.subr.mxu0 0.0
        %691 = vmatpush1.msra.mxu0 0.0
        %692 = vmatprep.subr.mxu0 0.0
        %693 = vmatpush1.msra.mxu0 0.0
        %694 = vmatprep.subr.mxu0 0.0
        %695 = vmatpush1.msra.mxu0 0.0
        %696 = vmatprep.subr.mxu0 0.0
        %697 = vmatpush1.msra.mxu0 0.0
        %698 = vmatprep.subr.mxu0 0.0
        %699 = vmatpush1.msra.mxu0 0.0
        %700 = vmatprep.subr.mxu0 0.0
        %701 = vmatpush1.msra.mxu0 0.0
        %702 = vmatprep.subr.mxu0 0.0
        %703 = vmatpush1.msra.mxu0 0.0
        %704 = vmatprep.subr.mxu0 0.0
        %705 = vmatpush1.msra.mxu0 0.0
        %706 = vmatprep.subr.mxu0 0.0
        %707 = vmatpush1.msra.mxu0 0.0
        %708 = vmatprep.subr.mxu0 0.0
        %709 = vmatpush1.msra.mxu0 0.0
        %710 = vmatprep.subr.mxu0 %v639
        %711 = vmatpush1.msra.mxu0 %v638
        %712 = vmatprep.subr.mxu0 0.0
        %713 = vmatpush2.msra.mxu0 0.0
        %714 = vmatprep.subr.mxu0 0.0
        %715 = vmatpush2.msra.mxu0 0.0
        %716 = vmatprep.subr.mxu0 0.0
        %717 = vmatpush2.msra.mxu0 0.0
        %718 = vmatprep.subr.mxu0 0.0
        %719 = vmatpush2.msra.mxu0 0.0
        %720 = vmatprep.subr.mxu0 0.0
        %721 = vmatpush2.msra.mxu0 0.0
        %722 = vmatprep.subr.mxu0 0.0
        %723 = vmatpush2.msra.mxu0 0.0
        %724 = vmatprep.subr.mxu0 0.0
        %725 = vmatpush2.msra.mxu0 0.0
        %726 = vmatprep.subr.mxu0 0.0
        %727 = vmatpush2.msra.mxu0 0.0
        %728 = vmatprep.subr.mxu0 0.0
        %729 = vmatpush2.msra.mxu0 0.0
        %730 = vmatprep.subr.mxu0 0.0
        %731 = vmatpush2.msra.mxu0 0.0
        %732 = vmatprep.subr.mxu0 0.0
        %733 = vmatpush2.msra.mxu0 0.0
        %734 = vmatprep.subr.mxu0 0.0
        %735 = vmatpush2.msra.mxu0 0.0
        %736 = vmatprep.subr.mxu0 0.0
        %737 = vmatpush2.msra.mxu0 0.0
        %738 = vmatprep.subr.mxu0 0.0
        %739 = vmatpush2.msra.mxu0 0.0
        %740 = vmatprep.subr.mxu0 0.0
        %741 = vmatpush2.msra.mxu0 0.0
        %742 = vmatprep.subr.mxu0 0.0
        %743 = vmatpush2.msra.mxu0 0.0
        %744 = vmatprep.mubr.f32.mxu0 0.0
        %745 = vmatmul.mubr.f32.gmra.mxu0 %v678
        %v746 = vpop.f32.mrf.mxu0
        %v747 = vadd.f32 %v649, %v746
        %v748 = vpop.f32.mrf.mxu0
        %v749 = vadd.f32 %v653, %v748
        %750 = vdwg.mxu0
        %751 = vmatprep.subr.mxu0 0.0
        %752 = vmatpush1.msra.mxu0 0.0
        %753 = vmatprep.subr.mxu0 0.0
        %754 = vmatpush1.msra.mxu0 0.0
        %755 = vmatprep.subr.mxu0 0.0
        %756 = vmatpush1.msra.mxu0 0.0
        %757 = vmatprep.subr.mxu0 0.0
        %758 = vmatpush1.msra.mxu0 0.0
        %759 = vmatprep.subr.mxu0 0.0
        %760 = vmatpush1.msra.mxu0 0.0
        %761 = vmatprep.subr.mxu0 0.0
        %762 = vmatpush1.msra.mxu0 0.0
        %763 = vmatprep.subr.mxu0 0.0
        %764 = vmatpush1.msra.mxu0 0.0
        %765 = vmatprep.subr.mxu0 0.0
        %766 = vmatpush1.msra.mxu0 0.0
        %767 = vmatprep.subr.mxu0 0.0
        %768 = vmatpush1.msra.mxu0 0.0
        %769 = vmatprep.subr.mxu0 0.0
        %770 = vmatpush1.msra.mxu0 0.0
        %771 = vmatprep.subr.mxu0 0.0
        %772 = vmatpush1.msra.mxu0 0.0
        %773 = vmatprep.subr.mxu0 0.0
        %774 = vmatpush1.msra.mxu0 0.0
        %775 = vmatprep.subr.mxu0 0.0
        %776 = vmatpush1.msra.mxu0 0.0
        %777 = vmatprep.subr.mxu0 0.0
        %778 = vmatpush1.msra.mxu0 0.0
        %779 = vmatprep.subr.mxu0 0.0
        %780 = vmatpush1.msra.mxu0 0.0
        %781 = vmatprep.subr.mxu0 %v641
        %782 = vmatpush1.msra.mxu0 %v640
        %783 = vmatprep.subr.mxu0 0.0
        %784 = vmatpush2.msra.mxu0 0.0
        %785 = vmatprep.subr.mxu0 0.0
        %786 = vmatpush2.msra.mxu0 0.0
        %787 = vmatprep.subr.mxu0 0.0
        %788 = vmatpush2.msra.mxu0 0.0
        %789 = vmatprep.subr.mxu0 0.0
        %790 = vmatpush2.msra.mxu0 0.0
        %791 = vmatprep.subr.mxu0 0.0
        %792 = vmatpush2.msra.mxu0 0.0
        %793 = vmatprep.subr.mxu0 0.0
        %794 = vmatpush2.msra.mxu0 0.0
        %795 = vmatprep.subr.mxu0 0.0
        %796 = vmatpush2.msra.mxu0 0.0
        %797 = vmatprep.subr.mxu0 0.0
        %798 = vmatpush2.msra.mxu0 0.0
        %799 = vmatprep.subr.mxu0 0.0
        %800 = vmatpush2.msra.mxu0 0.0
        %801 = vmatprep.subr.mxu0 0.0
        %802 = vmatpush2.msra.mxu0 0.0
        %803 = vmatprep.subr.mxu0 0.0
        %804 = vmatpush2.msra.mxu0 0.0
        %805 = vmatprep.subr.mxu0 0.0
        %806 = vmatpush2.msra.mxu0 0.0
        %807 = vmatprep.subr.mxu0 0.0
        %808 = vmatpush2.msra.mxu0 0.0
        %809 = vmatprep.subr.mxu0 0.0
        %810 = vmatpush2.msra.mxu0 0.0
        %811 = vmatprep.subr.mxu0 0.0
        %812 = vmatpush2.msra.mxu0 0.0
        %813 = vmatprep.subr.mxu0 0.0
        %814 = vmatpush2.msra.mxu0 0.0
        %815 = vmatprep.mubr.f32.mxu0 0.0
        %816 = vmatmul.mubr.f32.gmra.mxu0 %v678
        %v817 = vpop.f32.mrf.mxu0
        %v818 = vadd.f32 %v657, %v817
        %v819 = vpop.f32.mrf.mxu0
        %v820 = vadd.f32 %v661, %v819
        %821 = vdwg.mxu0
        %822 = vmatprep.subr.mxu0 0.0
        %823 = vmatpush1.msra.mxu0 0.0
        %824 = vmatprep.subr.mxu0 0.0
        %825 = vmatpush1.msra.mxu0 0.0
        %826 = vmatprep.subr.mxu0 0.0
        %827 = vmatpush1.msra.mxu0 0.0
        %828 = vmatprep.subr.mxu0 0.0
        %829 = vmatpush1.msra.mxu0 0.0
        %830 = vmatprep.subr.mxu0 0.0
        %831 = vmatpush1.msra.mxu0 0.0
        %832 = vmatprep.subr.mxu0 0.0
        %833 = vmatpush1.msra.mxu0 0.0
        %834 = vmatprep.subr.mxu0 0.0
        %835 = vmatpush1.msra.mxu0 0.0
        %836 = vmatprep.subr.mxu0 0.0
        %837 = vmatpush1.msra.mxu0 0.0
        %838 = vmatprep.subr.mxu0 0.0
        %839 = vmatpush1.msra.mxu0 0.0
        %840 = vmatprep.subr.mxu0 0.0
        %841 = vmatpush1.msra.mxu0 0.0
        %842 = vmatprep.subr.mxu0 0.0
        %843 = vmatpush1.msra.mxu0 0.0
        %844 = vmatprep.subr.mxu0 0.0
        %845 = vmatpush1.msra.mxu0 0.0
        %846 = vmatprep.subr.mxu0 0.0
        %847 = vmatpush1.msra.mxu0 0.0
        %848 = vmatprep.subr.mxu0 0.0
        %849 = vmatpush1.msra.mxu0 0.0
        %850 = vmatprep.subr.mxu0 0.0
        %851 = vmatpush1.msra.mxu0 0.0
        %852 = vmatprep.subr.mxu0 %v643
        %853 = vmatpush1.msra.mxu0 %v642
        %854 = vmatprep.subr.mxu0 0.0
        %855 = vmatpush2.msra.mxu0 0.0
        %856 = vmatprep.subr.mxu0 0.0
        %857 = vmatpush2.msra.mxu0 0.0
        %858 = vmatprep.subr.mxu0 0.0
        %859 = vmatpush2.msra.mxu0 0.0
        %860 = vmatprep.subr.mxu0 0.0
        %861 = vmatpush2.msra.mxu0 0.0
        %862 = vmatprep.subr.mxu0 0.0
        %863 = vmatpush2.msra.mxu0 0.0
        %864 = vmatprep.subr.mxu0 0.0
        %865 = vmatpush2.msra.mxu0 0.0
        %866 = vmatprep.subr.mxu0 0.0
        %867 = vmatpush2.msra.mxu0 0.0
        %868 = vmatprep.subr.mxu0 0.0
        %869 = vmatpush2.msra.mxu0 0.0
        %870 = vmatprep.subr.mxu0 0.0
        %871 = vmatpush2.msra.mxu0 0.0
        %872 = vmatprep.subr.mxu0 0.0
        %873 = vmatpush2.msra.mxu0 0.0
        %874 = vmatprep.subr.mxu0 0.0
        %875 = vmatpush2.msra.mxu0 0.0
        %876 = vmatprep.subr.mxu0 0.0
        %877 = vmatpush2.msra.mxu0 0.0
        %878 = vmatprep.subr.mxu0 0.0
        %879 = vmatpush2.msra.mxu0 0.0
        %880 = vmatprep.subr.mxu0 0.0
        %881 = vmatpush2.msra.mxu0 0.0
        %882 = vmatprep.subr.mxu0 0.0
        %883 = vmatpush2.msra.mxu0 0.0
        %884 = vmatprep.subr.mxu0 0.0
        %885 = vmatpush2.msra.mxu0 0.0
        %886 = vmatprep.mubr.f32.mxu0 0.0
        %887 = vmatmul.mubr.f32.gmra.mxu0 %v678
        %v888 = vpop.f32.mrf.mxu0
        %v889 = vadd.f32 %v665, %v888
        %v890 = vpop.f32.mrf.mxu0
        %v891 = vadd.f32 %v669, %v890
        %892 = vdwg.mxu0
        %v893 = vmul.f32 %v636, %v636
        %v894 = vld [vmem:[#allocation14] sm:$0xff]
        %v895 = vld [vmem:[#allocation14 + $0x8] sm:$0xff]
        %v896 = vld [vmem:[#allocation14 + $0x10] sm:$0xff]
        %v897 = vld [vmem:[#allocation14 + $0x18] sm:$0xff]
        %v898 = vld [vmem:[#allocation14 + $0x20] sm:$0xff]
        %v899 = vld [vmem:[#allocation14 + $0x28] sm:$0xff]
        %v900 = vld [vmem:[#allocation14 + $0x30] sm:$0xff]
        %v901 = vld [vmem:[#allocation14 + $0x38] sm:$0xff]
        %v902 = vld [vmem:[#allocation14 + $0x40] sm:$0xff]
        %v903 = vld [vmem:[#allocation14 + $0x48] sm:$0xff]
        %v904 = vld [vmem:[#allocation14 + $0x50] sm:$0xff]
        %v905 = vld [vmem:[#allocation14 + $0x58] sm:$0xff]
        %v906 = vld [vmem:[#allocation14 + $0x60] sm:$0xff]
        %v907 = vld [vmem:[#allocation14 + $0x68] sm:$0xff]
        %v908 = vld [vmem:[#allocation14 + $0x70] sm:$0xff]
        %v909 = vld [vmem:[#allocation14 + $0x78] sm:$0xff]
        %v910 = vld [vmem:[#allocation14 + $0x80] sm:$0xff]
        %v911 = vld [vmem:[#allocation14 + $0x88] sm:$0xff]
        %v912 = vld [vmem:[#allocation14 + $0x90] sm:$0xff]
        %v913 = vld [vmem:[#allocation14 + $0x98] sm:$0xff]
        %v914 = vld [vmem:[#allocation14 + $0xa0] sm:$0xff]
        %v915 = vld [vmem:[#allocation14 + $0xa8] sm:$0xff]
        %v916 = vld [vmem:[#allocation14 + $0xb0] sm:$0xff]
        %v917 = vld [vmem:[#allocation14 + $0xb8] sm:$0xff]
        %v918 = vld [vmem:[#allocation14 + $0xc0] sm:$0xff]
        %v919 = vld [vmem:[#allocation14 + $0xc8] sm:$0xff]
        %v920 = vld [vmem:[#allocation14 + $0xd0] sm:$0xff]
        %v921 = vld [vmem:[#allocation14 + $0xd8] sm:$0xff]
        %v922 = vld [vmem:[#allocation14 + $0xe0] sm:$0xff]
        %v923 = vld [vmem:[#allocation14 + $0xe8] sm:$0xff]
        %v924 = vld [vmem:[#allocation14 + $0xf0] sm:$0xff]
        %v925 = vld [vmem:[#allocation14 + $0xf8] sm:$0xff]
        %v926 = vld [vmem:[#allocation14 + $0x100] sm:$0xff]
        %v927 = vld [vmem:[#allocation14 + $0x108] sm:$0xff]
        %v928 = vld [vmem:[#allocation14 + $0x110] sm:$0xff]
        %v929 = vld [vmem:[#allocation14 + $0x118] sm:$0xff]
        %v930 = vld [vmem:[#allocation14 + $0x120] sm:$0xff]
        %v931 = vld [vmem:[#allocation14 + $0x128] sm:$0xff]
        %v932 = vld [vmem:[#allocation14 + $0x130] sm:$0xff]
        %v933 = vld [vmem:[#allocation14 + $0x138] sm:$0xff]
        %v934 = vld [vmem:[#allocation14 + $0x140] sm:$0xff]
        %v935 = vld [vmem:[#allocation14 + $0x148] sm:$0xff]
        %v936 = vld [vmem:[#allocation14 + $0x150] sm:$0xff]
        %v937 = vld [vmem:[#allocation14 + $0x158] sm:$0xff]
        %v938 = vld [vmem:[#allocation14 + $0x160] sm:$0xff]
        %v939 = vld [vmem:[#allocation14 + $0x168] sm:$0xff]
        %v940 = vld [vmem:[#allocation14 + $0x170] sm:$0xff]
        %v941 = vld [vmem:[#allocation14 + $0x178] sm:$0xff]
        %v942 = vld [vmem:[#allocation14 + $0x180] sm:$0xff]
        %v943 = vld [vmem:[#allocation14 + $0x188] sm:$0xff]
        %v944 = vld [vmem:[#allocation14 + $0x190] sm:$0xff]
        %v945 = vld [vmem:[#allocation14 + $0x198] sm:$0xff]
        %v946 = vld [vmem:[#allocation14 + $0x1a0] sm:$0xff]
        %v947 = vld [vmem:[#allocation14 + $0x1a8] sm:$0xff]
        %v948 = vld [vmem:[#allocation14 + $0x1b0] sm:$0xff]
        %v949 = vld [vmem:[#allocation14 + $0x1b8] sm:$0xff]
        %v950 = vld [vmem:[#allocation14 + $0x1c0] sm:$0xff]
        %v951 = vld [vmem:[#allocation14 + $0x1c8] sm:$0xff]
        %v952 = vld [vmem:[#allocation14 + $0x1d0] sm:$0xff]
        %v953 = vld [vmem:[#allocation14 + $0x1d8] sm:$0xff]
        %v954 = vld [vmem:[#allocation14 + $0x1e0] sm:$0xff]
        %v955 = vld [vmem:[#allocation14 + $0x1e8] sm:$0xff]
        %v956 = vld [vmem:[#allocation14 + $0x1f0] sm:$0xff]
        %v957 = vld [vmem:[#allocation14 + $0x1f8] sm:$0xff]
        %v958 = vld [vmem:[#allocation14 + $0x200] sm:$0xff]
        %v959 = vld [vmem:[#allocation14 + $0x208] sm:$0xff]
        %v960 = vld [vmem:[#allocation14 + $0x210] sm:$0xff]
        %v961 = vld [vmem:[#allocation14 + $0x218] sm:$0xff]
        %v962 = vld [vmem:[#allocation14 + $0x220] sm:$0xff]
        %v963 = vld [vmem:[#allocation14 + $0x228] sm:$0xff]
        %v964 = vld [vmem:[#allocation14 + $0x230] sm:$0xff]
        %v965 = vld [vmem:[#allocation14 + $0x238] sm:$0xff]
        %v966 = vld [vmem:[#allocation14 + $0x240] sm:$0xff]
        %v967 = vld [vmem:[#allocation14 + $0x248] sm:$0xff]
        %v968 = vld [vmem:[#allocation14 + $0x250] sm:$0xff]
        %v969 = vld [vmem:[#allocation14 + $0x258] sm:$0xff]
        %v970 = vld [vmem:[#allocation14 + $0x260] sm:$0xff]
        %v971 = vld [vmem:[#allocation14 + $0x268] sm:$0xff]
        %v972 = vld [vmem:[#allocation14 + $0x270] sm:$0xff]
        %v973 = vld [vmem:[#allocation14 + $0x278] sm:$0xff]
        %v974 = vld [vmem:[#allocation14 + $0x280] sm:$0xff]
        %v975 = vld [vmem:[#allocation14 + $0x288] sm:$0xff]
        %v976 = vld [vmem:[#allocation14 + $0x290] sm:$0xff]
        %v977 = vld [vmem:[#allocation14 + $0x298] sm:$0xff]
        %v978 = vld [vmem:[#allocation14 + $0x2a0] sm:$0xff]
        %v979 = vld [vmem:[#allocation14 + $0x2a8] sm:$0xff]
        %v980 = vld [vmem:[#allocation14 + $0x2b0] sm:$0xff]
        %v981 = vld [vmem:[#allocation14 + $0x2b8] sm:$0xff]
        %v982 = vld [vmem:[#allocation14 + $0x2c0] sm:$0xff]
        %v983 = vld [vmem:[#allocation14 + $0x2c8] sm:$0xff]
        %v984 = vld [vmem:[#allocation14 + $0x2d0] sm:$0xff]
        %v985 = vld [vmem:[#allocation14 + $0x2d8] sm:$0xff]
        %v986 = vld [vmem:[#allocation14 + $0x2e0] sm:$0xff]
        %v987 = vld [vmem:[#allocation14 + $0x2e8] sm:$0xff]
        %v988 = vld [vmem:[#allocation14 + $0x2f0] sm:$0xff]
        %v989 = vld [vmem:[#allocation14 + $0x2f8] sm:$0xff]
        %v990 = vld [vmem:[#allocation14 + $0x300] sm:$0xff]
        %v991 = vld [vmem:[#allocation14 + $0x308] sm:$0xff]
        %v992 = vld [vmem:[#allocation14 + $0x310] sm:$0xff]
        %v993 = vld [vmem:[#allocation14 + $0x318] sm:$0xff]
        %v994 = vld [vmem:[#allocation14 + $0x320] sm:$0xff]
        %v995 = vld [vmem:[#allocation14 + $0x328] sm:$0xff]
        %v996 = vld [vmem:[#allocation14 + $0x330] sm:$0xff]
        %v997 = vld [vmem:[#allocation14 + $0x338] sm:$0xff]
        %v998 = vld [vmem:[#allocation14 + $0x340] sm:$0xff]
        %v999 = vld [vmem:[#allocation14 + $0x348] sm:$0xff]
        %v1000 = vld [vmem:[#allocation14 + $0x350] sm:$0xff]
        %v1001 = vld [vmem:[#allocation14 + $0x358] sm:$0xff]
        %v1002 = vld [vmem:[#allocation14 + $0x360] sm:$0xff]
        %v1003 = vld [vmem:[#allocation14 + $0x368] sm:$0xff]
        %v1004 = vld [vmem:[#allocation14 + $0x370] sm:$0xff]
        %v1005 = vld [vmem:[#allocation14 + $0x378] sm:$0xff]
        %v1006 = vld [vmem:[#allocation14 + $0x380] sm:$0xff]
        %v1007 = vld [vmem:[#allocation14 + $0x388] sm:$0xff]
        %v1008 = vld [vmem:[#allocation14 + $0x390] sm:$0xff]
        %v1009 = vld [vmem:[#allocation14 + $0x398] sm:$0xff]
        %v1010 = vld [vmem:[#allocation14 + $0x3a0] sm:$0xff]
        %v1011 = vld [vmem:[#allocation14 + $0x3a8] sm:$0xff]
        %v1012 = vld [vmem:[#allocation14 + $0x3b0] sm:$0xff]
        %v1013 = vld [vmem:[#allocation14 + $0x3b8] sm:$0xff]
        %v1014 = vld [vmem:[#allocation14 + $0x3c0] sm:$0xff]
        %v1015 = vld [vmem:[#allocation14 + $0x3c8] sm:$0xff]
        %v1016 = vld [vmem:[#allocation14 + $0x3d0] sm:$0xff]
        %v1017 = vld [vmem:[#allocation14 + $0x3d8] sm:$0xff]
        %v1018 = vld [vmem:[#allocation14 + $0x3e0] sm:$0xff]
        %v1019 = vld [vmem:[#allocation14 + $0x3e8] sm:$0xff]
        %v1020 = vld [vmem:[#allocation14 + $0x3f0] sm:$0xff]
        %v1021 = vld [vmem:[#allocation14 + $0x3f8] sm:$0xff]
        %v1022 = vld [vmem:[#allocation14 + $0x400] sm:$0xff]
        %v1023 = vld [vmem:[#allocation14 + $0x408] sm:$0xff]
        %v1024 = vld [vmem:[#allocation14 + $0x410] sm:$0xff]
        %v1025 = vld [vmem:[#allocation14 + $0x418] sm:$0xff]
        %v1026 = vld [vmem:[#allocation14 + $0x420] sm:$0xff]
        %v1027 = vld [vmem:[#allocation14 + $0x428] sm:$0xff]
        %v1028 = vld [vmem:[#allocation14 + $0x430] sm:$0xff]
        %v1029 = vld [vmem:[#allocation14 + $0x438] sm:$0xff]
        %v1030 = vld [vmem:[#allocation14 + $0x440] sm:$0xff]
        %v1031 = vld [vmem:[#allocation14 + $0x448] sm:$0xff]
        %v1032 = vld [vmem:[#allocation14 + $0x450] sm:$0xff]
        %v1033 = vld [vmem:[#allocation14 + $0x458] sm:$0xff]
        %v1034 = vld [vmem:[#allocation14 + $0x460] sm:$0xff]
        %v1035 = vld [vmem:[#allocation14 + $0x468] sm:$0xff]
        %v1036 = vld [vmem:[#allocation14 + $0x470] sm:$0xff]
        %v1037 = vld [vmem:[#allocation14 + $0x478] sm:$0xff]
        %v1038 = vld [vmem:[#allocation14 + $0x480] sm:$0xff]
        %v1039 = vld [vmem:[#allocation14 + $0x488] sm:$0xff]
        %v1040 = vld [vmem:[#allocation14 + $0x490] sm:$0xff]
        %v1041 = vld [vmem:[#allocation14 + $0x498] sm:$0xff]
        %v1042 = vld [vmem:[#allocation14 + $0x4a0] sm:$0xff]
        %v1043 = vld [vmem:[#allocation14 + $0x4a8] sm:$0xff]
        %v1044 = vld [vmem:[#allocation14 + $0x4b0] sm:$0xff]
        %v1045 = vld [vmem:[#allocation14 + $0x4b8] sm:$0xff]
        %v1046 = vld [vmem:[#allocation14 + $0x4c0] sm:$0xff]
        %v1047 = vld [vmem:[#allocation14 + $0x4c8] sm:$0xff]
        %v1048 = vld [vmem:[#allocation14 + $0x4d0] sm:$0xff]
        %v1049 = vld [vmem:[#allocation14 + $0x4d8] sm:$0xff]
        %v1050 = vld [vmem:[#allocation14 + $0x4e0] sm:$0xff]
        %v1051 = vld [vmem:[#allocation14 + $0x4e8] sm:$0xff]
        %v1052 = vld [vmem:[#allocation14 + $0x4f0] sm:$0xff]
        %v1053 = vld [vmem:[#allocation14 + $0x4f8] sm:$0xff]
        %v1054 = vld [vmem:[#allocation14 + $0x500] sm:$0xff]
        %v1055 = vld [vmem:[#allocation14 + $0x508] sm:$0xff]
        %v1056 = vld [vmem:[#allocation14 + $0x510] sm:$0xff]
        %v1057 = vld [vmem:[#allocation14 + $0x518] sm:$0xff]
        %v1058 = vld [vmem:[#allocation14 + $0x520] sm:$0xff]
        %v1059 = vld [vmem:[#allocation14 + $0x528] sm:$0xff]
        %v1060 = vld [vmem:[#allocation14 + $0x530] sm:$0xff]
        %v1061 = vld [vmem:[#allocation14 + $0x538] sm:$0xff]
        %v1062 = vld [vmem:[#allocation14 + $0x540] sm:$0xff]
        %v1063 = vld [vmem:[#allocation14 + $0x548] sm:$0xff]
        %v1064 = vld [vmem:[#allocation14 + $0x550] sm:$0xff]
        %v1065 = vld [vmem:[#allocation14 + $0x558] sm:$0xff]
        %v1066 = vld [vmem:[#allocation14 + $0x560] sm:$0xff]
        %v1067 = vld [vmem:[#allocation14 + $0x568] sm:$0xff]
        %v1068 = vld [vmem:[#allocation14 + $0x570] sm:$0xff]
        %v1069 = vld [vmem:[#allocation14 + $0x578] sm:$0xff]
        %v1070 = vld [vmem:[#allocation14 + $0x580] sm:$0xff]
        %v1071 = vld [vmem:[#allocation14 + $0x588] sm:$0xff]
        %v1072 = vld [vmem:[#allocation14 + $0x590] sm:$0xff]
        %v1073 = vld [vmem:[#allocation14 + $0x598] sm:$0xff]
        %v1074 = vld [vmem:[#allocation14 + $0x5a0] sm:$0xff]
        %v1075 = vld [vmem:[#allocation14 + $0x5a8] sm:$0xff]
        %v1076 = vld [vmem:[#allocation14 + $0x5b0] sm:$0xff]
        %v1077 = vld [vmem:[#allocation14 + $0x5b8] sm:$0xff]
        %v1078 = vld [vmem:[#allocation14 + $0x5c0] sm:$0xff]
        %v1079 = vld [vmem:[#allocation14 + $0x5c8] sm:$0xff]
        %v1080 = vld [vmem:[#allocation14 + $0x5d0] sm:$0xff]
        %v1081 = vld [vmem:[#allocation14 + $0x5d8] sm:$0xff]
        %v1082 = vld [vmem:[#allocation14 + $0x5e0] sm:$0xff]
        %v1083 = vld [vmem:[#allocation14 + $0x5e8] sm:$0xff]
        %v1084 = vld [vmem:[#allocation14 + $0x5f0] sm:$0xff]
        %v1085 = vld [vmem:[#allocation14 + $0x5f8] sm:$0xff]
        %v1086 = vld [vmem:[%s8] sm:$0x3f]
        %v1088 = vlaneseq
        %v1089 = vshrl.u32 %v1088, 7
        %v1090 = vsub.s32 0, %v1089
        %v1091 = vrot.slane %v1086, %v1090
        %v1092 = vlaneseq
        %v1093 = vshrl.u32 %v1092, 7
        %v1094 = vsub.s32 1, %v1093
        %v1095 = vrot.slane %v1086, %v1094
        %v1096 = vlaneseq
        %v1097 = vshrl.u32 %v1096, 7
        %v1098 = vsub.s32 2, %v1097
        %v1099 = vrot.slane %v1086, %v1098
        %v1100 = vlaneseq
        %v1101 = vshrl.u32 %v1100, 7
        %v1102 = vsub.s32 3, %v1101
        %v1103 = vrot.slane %v1086, %v1102
        %v1104 = vlaneseq
        %v1105 = vshrl.u32 %v1104, 7
        %v1106 = vsub.s32 4, %v1105
        %v1107 = vrot.slane %v1086, %v1106
        %v1108 = vlaneseq
        %v1109 = vshrl.u32 %v1108, 7
        %v1110 = vsub.s32 5, %v1109
        %v1111 = vrot.slane %v1086, %v1110
        %1118 = vmatprep.subr.mxu0 %v985
        %1119 = vmatpush1.msra.mxu0 %v984
        %1120 = vmatprep.subr.mxu0 %v979
        %1121 = vmatpush1.msra.mxu0 %v978
        %1122 = vmatprep.subr.mxu0 %v973
        %1123 = vmatpush1.msra.mxu0 %v972
        %1124 = vmatprep.subr.mxu0 %v967
        %1125 = vmatpush1.msra.mxu0 %v966
        %1126 = vmatprep.subr.mxu0 %v961
        %1127 = vmatpush1.msra.mxu0 %v960
        %1128 = vmatprep.subr.mxu0 %v955
        %1129 = vmatpush1.msra.mxu0 %v954
        %1130 = vmatprep.subr.mxu0 %v949
        %1131 = vmatpush1.msra.mxu0 %v948
        %1132 = vmatprep.subr.mxu0 %v943
        %1133 = vmatpush1.msra.mxu0 %v942
        %1134 = vmatprep.subr.mxu0 %v937
        %1135 = vmatpush1.msra.mxu0 %v936
        %1136 = vmatprep.subr.mxu0 %v931
        %1137 = vmatpush1.msra.mxu0 %v930
        %1138 = vmatprep.subr.mxu0 %v925
        %1139 = vmatpush1.msra.mxu0 %v924
        %1140 = vmatprep.subr.mxu0 %v919
        %1141 = vmatpush1.msra.mxu0 %v918
        %1142 = vmatprep.subr.mxu0 %v913
        %1143 = vmatpush1.msra.mxu0 %v912
        %1144 = vmatprep.subr.mxu0 %v907
        %1145 = vmatpush1.msra.mxu0 %v906
        %1146 = vmatprep.subr.mxu0 %v901
        %1147 = vmatpush1.msra.mxu0 %v900
        %1148 = vmatprep.subr.mxu0 %v895
        %1149 = vmatpush1.msra.mxu0 %v894
        %1150 = vmatprep.subr.mxu0 %v1081
        %1151 = vmatpush2.msra.mxu0 %v1080
        %1152 = vmatprep.subr.mxu0 %v1075
        %1153 = vmatpush2.msra.mxu0 %v1074
        %1154 = vmatprep.subr.mxu0 %v1069
        %1155 = vmatpush2.msra.mxu0 %v1068
        %1156 = vmatprep.subr.mxu0 %v1063
        %1157 = vmatpush2.msra.mxu0 %v1062
        %1158 = vmatprep.subr.mxu0 %v1057
        %1159 = vmatpush2.msra.mxu0 %v1056
        %1160 = vmatprep.subr.mxu0 %v1051
        %1161 = vmatpush2.msra.mxu0 %v1050
        %1162 = vmatprep.subr.mxu0 %v1045
        %1163 = vmatpush2.msra.mxu0 %v1044
        %1164 = vmatprep.subr.mxu0 %v1039
        %1165 = vmatpush2.msra.mxu0 %v1038
        %1166 = vmatprep.subr.mxu0 %v1033
        %1167 = vmatpush2.msra.mxu0 %v1032
        %1168 = vmatprep.subr.mxu0 %v1027
        %1169 = vmatpush2.msra.mxu0 %v1026
        %1170 = vmatprep.subr.mxu0 %v1021
        %1171 = vmatpush2.msra.mxu0 %v1020
        %1172 = vmatprep.subr.mxu0 %v1015
        %1173 = vmatpush2.msra.mxu0 %v1014
        %1174 = vmatprep.subr.mxu0 %v1009
        %1175 = vmatpush2.msra.mxu0 %v1008
        %1176 = vmatprep.subr.mxu0 %v1003
        %1177 = vmatpush2.msra.mxu0 %v1002
        %1178 = vmatprep.subr.mxu0 %v997
        %1179 = vmatpush2.msra.mxu0 %v996
        %1180 = vmatprep.subr.mxu0 %v991
        %1181 = vmatpush2.msra.mxu0 %v990
        %1182 = vmatprep.mubr.f32.mxu0 %v893
        %1183 = vmatmul.mubr.f32.gmra.mxu0 %v636
        %v1184 = vpop.f32.mrf.mxu0
        %v1185 = vadd.f32 %v1091, %v1184
        %v1186 = vpop.f32.mrf.mxu0
        %v1187 = vadd.f32 %v1095, %v1186
        %1188 = vdwg.mxu0
        %1189 = vmatprep.subr.mxu0 %v987
        %1190 = vmatpush1.msra.mxu0 %v986
        %1191 = vmatprep.subr.mxu0 %v981
        %1192 = vmatpush1.msra.mxu0 %v980
        %1193 = vmatprep.subr.mxu0 %v975
        %1194 = vmatpush1.msra.mxu0 %v974
        %1195 = vmatprep.subr.mxu0 %v969
        %1196 = vmatpush1.msra.mxu0 %v968
        %1197 = vmatprep.subr.mxu0 %v963
        %1198 = vmatpush1.msra.mxu0 %v962
        %1199 = vmatprep.subr.mxu0 %v957
        %1200 = vmatpush1.msra.mxu0 %v956
        %1201 = vmatprep.subr.mxu0 %v951
        %1202 = vmatpush1.msra.mxu0 %v950
        %1203 = vmatprep.subr.mxu0 %v945
        %1204 = vmatpush1.msra.mxu0 %v944
        %1205 = vmatprep.subr.mxu0 %v939
        %1206 = vmatpush1.msra.mxu0 %v938
        %1207 = vmatprep.subr.mxu0 %v933
        %1208 = vmatpush1.msra.mxu0 %v932
        %1209 = vmatprep.subr.mxu0 %v927
        %1210 = vmatpush1.msra.mxu0 %v926
        %1211 = vmatprep.subr.mxu0 %v921
        %1212 = vmatpush1.msra.mxu0 %v920
        %1213 = vmatprep.subr.mxu0 %v915
        %1214 = vmatpush1.msra.mxu0 %v914
        %1215 = vmatprep.subr.mxu0 %v909
        %1216 = vmatpush1.msra.mxu0 %v908
        %1217 = vmatprep.subr.mxu0 %v903
        %1218 = vmatpush1.msra.mxu0 %v902
        %1219 = vmatprep.subr.mxu0 %v897
        %1220 = vmatpush1.msra.mxu0 %v896
        %1221 = vmatprep.subr.mxu0 %v1083
        %1222 = vmatpush2.msra.mxu0 %v1082
        %1223 = vmatprep.subr.mxu0 %v1077
        %1224 = vmatpush2.msra.mxu0 %v1076
        %1225 = vmatprep.subr.mxu0 %v1071
        %1226 = vmatpush2.msra.mxu0 %v1070
        %1227 = vmatprep.subr.mxu0 %v1065
        %1228 = vmatpush2.msra.mxu0 %v1064
        %1229 = vmatprep.subr.mxu0 %v1059
        %1230 = vmatpush2.msra.mxu0 %v1058
        %1231 = vmatprep.subr.mxu0 %v1053
        %1232 = vmatpush2.msra.mxu0 %v1052
        %1233 = vmatprep.subr.mxu0 %v1047
        %1234 = vmatpush2.msra.mxu0 %v1046
        %1235 = vmatprep.subr.mxu0 %v1041
        %1236 = vmatpush2.msra.mxu0 %v1040
        %1237 = vmatprep.subr.mxu0 %v1035
        %1238 = vmatpush2.msra.mxu0 %v1034
        %1239 = vmatprep.subr.mxu0 %v1029
        %1240 = vmatpush2.msra.mxu0 %v1028
        %1241 = vmatprep.subr.mxu0 %v1023
        %1242 = vmatpush2.msra.mxu0 %v1022
        %1243 = vmatprep.subr.mxu0 %v1017
        %1244 = vmatpush2.msra.mxu0 %v1016
        %1245 = vmatprep.subr.mxu0 %v1011
        %1246 = vmatpush2.msra.mxu0 %v1010
        %1247 = vmatprep.subr.mxu0 %v1005
        %1248 = vmatpush2.msra.mxu0 %v1004
        %1249 = vmatprep.subr.mxu0 %v999
        %1250 = vmatpush2.msra.mxu0 %v998
        %1251 = vmatprep.subr.mxu0 %v993
        %1252 = vmatpush2.msra.mxu0 %v992
        %1253 = vmatprep.mubr.f32.mxu0 %v893
        %1254 = vmatmul.mubr.f32.gmra.mxu0 %v636
        %v1255 = vpop.f32.mrf.mxu0
        %v1256 = vadd.f32 %v1099, %v1255
        %v1257 = vpop.f32.mrf.mxu0
        %v1258 = vadd.f32 %v1103, %v1257
        %1259 = vdwg.mxu0
        %1260 = vmatprep.subr.mxu0 %v989
        %1261 = vmatpush1.msra.mxu0 %v988
        %1262 = vmatprep.subr.mxu0 %v983
        %1263 = vmatpush1.msra.mxu0 %v982
        %1264 = vmatprep.subr.mxu0 %v977
        %1265 = vmatpush1.msra.mxu0 %v976
        %1266 = vmatprep.subr.mxu0 %v971
        %1267 = vmatpush1.msra.mxu0 %v970
        %1268 = vmatprep.subr.mxu0 %v965
        %1269 = vmatpush1.msra.mxu0 %v964
        %1270 = vmatprep.subr.mxu0 %v959
        %1271 = vmatpush1.msra.mxu0 %v958
        %1272 = vmatprep.subr.mxu0 %v953
        %1273 = vmatpush1.msra.mxu0 %v952
        %1274 = vmatprep.subr.mxu0 %v947
        %1275 = vmatpush1.msra.mxu0 %v946
        %1276 = vmatprep.subr.mxu0 %v941
        %1277 = vmatpush1.msra.mxu0 %v940
        %1278 = vmatprep.subr.mxu0 %v935
        %1279 = vmatpush1.msra.mxu0 %v934
        %1280 = vmatprep.subr.mxu0 %v929
        %1281 = vmatpush1.msra.mxu0 %v928
        %1282 = vmatprep.subr.mxu0 %v923
        %1283 = vmatpush1.msra.mxu0 %v922
        %1284 = vmatprep.subr.mxu0 %v917
        %1285 = vmatpush1.msra.mxu0 %v916
        %1286 = vmatprep.subr.mxu0 %v911
        %1287 = vmatpush1.msra.mxu0 %v910
        %1288 = vmatprep.subr.mxu0 %v905
        %1289 = vmatpush1.msra.mxu0 %v904
        %1290 = vmatprep.subr.mxu0 %v899
        %1291 = vmatpush1.msra.mxu0 %v898
        %1292 = vmatprep.subr.mxu0 %v1085
        %1293 = vmatpush2.msra.mxu0 %v1084
        %1294 = vmatprep.subr.mxu0 %v1079
        %1295 = vmatpush2.msra.mxu0 %v1078
        %1296 = vmatprep.subr.mxu0 %v1073
        %1297 = vmatpush2.msra.mxu0 %v1072
        %1298 = vmatprep.subr.mxu0 %v1067
        %1299 = vmatpush2.msra.mxu0 %v1066
        %1300 = vmatprep.subr.mxu0 %v1061
        %1301 = vmatpush2.msra.mxu0 %v1060
        %1302 = vmatprep.subr.mxu0 %v1055
        %1303 = vmatpush2.msra.mxu0 %v1054
        %1304 = vmatprep.subr.mxu0 %v1049
        %1305 = vmatpush2.msra.mxu0 %v1048
        %1306 = vmatprep.subr.mxu0 %v1043
        %1307 = vmatpush2.msra.mxu0 %v1042
        %1308 = vmatprep.subr.mxu0 %v1037
        %1309 = vmatpush2.msra.mxu0 %v1036
        %1310 = vmatprep.subr.mxu0 %v1031
        %1311 = vmatpush2.msra.mxu0 %v1030
        %1312 = vmatprep.subr.mxu0 %v1025
        %1313 = vmatpush2.msra.mxu0 %v1024
        %1314 = vmatprep.subr.mxu0 %v1019
        %1315 = vmatpush2.msra.mxu0 %v1018
        %1316 = vmatprep.subr.mxu0 %v1013
        %1317 = vmatpush2.msra.mxu0 %v1012
        %1318 = vmatprep.subr.mxu0 %v1007
        %1319 = vmatpush2.msra.mxu0 %v1006
        %1320 = vmatprep.subr.mxu0 %v1001
        %1321 = vmatpush2.msra.mxu0 %v1000
        %1322 = vmatprep.subr.mxu0 %v995
        %1323 = vmatpush2.msra.mxu0 %v994
        %1324 = vmatprep.mubr.f32.mxu0 %v893
        %1325 = vmatmul.mubr.f32.gmra.mxu0 %v636
        %v1326 = vpop.f32.mrf.mxu0
        %v1327 = vadd.f32 %v1107, %v1326
        %v1328 = vpop.f32.mrf.mxu0
        %v1329 = vadd.f32 %v1111, %v1328
        %1330 = vdwg.mxu0
        %v1331 = vadd.f32 %v820, 1e-08
        %v1332 = vadd.f32 %v889, 1e-08
        %v1333 = vadd.f32 %v891, 1e-08
        %v1334 = vrsqrt.pop %v1331
        %v1335 = vmul.f32 %v1331, %v1334
        %vm1336 = vcmp.eq.f32.partialorder %v1331, inf
        %v1337 = vsel %vm1336, %v1331, %v1335
        %vm1338 = vcmp.eq.f32.partialorder %v1331, 0.0
        %v1339 = vand.u32 %v1331, 2147483648
        %v1340 = vsel %vm1338, %v1339, %v1337
        %v1341 = vrsqrt.pop %v1332
        %v1342 = vmul.f32 %v1332, %v1341
        %vm1343 = vcmp.eq.f32.partialorder %v1332, inf
        %v1344 = vsel %vm1343, %v1332, %v1342
        %vm1345 = vcmp.eq.f32.partialorder %v1332, 0.0
        %v1346 = vand.u32 %v1332, 2147483648
        %v1347 = vsel %vm1345, %v1346, %v1344
        %v1348 = vrsqrt.pop %v1333
        %v1349 = vmul.f32 %v1333, %v1348
        %vm1350 = vcmp.eq.f32.partialorder %v1333, inf
        %v1351 = vsel %vm1350, %v1333, %v1349
        %vm1352 = vcmp.eq.f32.partialorder %v1333, 0.0
        %v1353 = vand.u32 %v1333, 2147483648
        %v1354 = vsel %vm1352, %v1353, %v1351
        %v1355 = vld [vmem:[%s544] sm:$0xff]
        %v1356 = vld [vmem:[%s544 + $0x8] sm:$0xff]
        %v1357 = vld [vmem:[%s544 + $0x10] sm:$0xff]
        %v1358 = vmul.f32 %v1340, %v1355
        %v1359 = vmul.f32 %v1347, %v1356
        %v1360 = vmul.f32 %v1354, %v1357
        %v1361 = vadd.f32 %v747, %v1358
        %v1362 = vadd.f32 %v749, %v1359
        %v1363 = vadd.f32 %v818, %v1360
        %v1364 = vadd.f32 %v1258, 1e-08
        %v1365 = vadd.f32 %v1327, 1e-08
        %v1366 = vadd.f32 %v1329, 1e-08
        %v1367 = vrsqrt.pop %v1364
        %v1368 = vmul.f32 %v1364, %v1367
        %vm1369 = vcmp.eq.f32.partialorder %v1364, inf
        %v1370 = vsel %vm1369, %v1364, %v1368
        %vm1371 = vcmp.eq.f32.partialorder %v1364, 0.0
        %v1372 = vand.u32 %v1364, 2147483648
        %v1373 = vsel %vm1371, %v1372, %v1370
        %v1374 = vrsqrt.pop %v1365
        %v1375 = vmul.f32 %v1365, %v1374
        %vm1376 = vcmp.eq.f32.partialorder %v1365, inf
        %v1377 = vsel %vm1376, %v1365, %v1375
        %vm1378 = vcmp.eq.f32.partialorder %v1365, 0.0
        %v1379 = vand.u32 %v1365, 2147483648
        %v1380 = vsel %vm1378, %v1379, %v1377
        %v1381 = vrsqrt.pop %v1366
        %v1382 = vmul.f32 %v1366, %v1381
        %vm1383 = vcmp.eq.f32.partialorder %v1366, inf
        %v1384 = vsel %vm1383, %v1366, %v1382
        %vm1385 = vcmp.eq.f32.partialorder %v1366, 0.0
        %v1386 = vand.u32 %v1366, 2147483648
        %v1387 = vsel %vm1385, %v1386, %v1384
        %v1388 = vld [vmem:[%s553] sm:$0xff]
        %v1389 = vld [vmem:[%s553 + $0x8] sm:$0xff]
        %v1390 = vld [vmem:[%s553 + $0x10] sm:$0xff]
        %v1391 = vmul.f32 %v1373, %v1388
        %v1392 = vmul.f32 %v1380, %v1389
        %v1393 = vmul.f32 %v1387, %v1390
        %v1394 = vadd.f32 %v1185, %v1391
        %v1395 = vadd.f32 %v1187, %v1392
        %v1396 = vadd.f32 %v1256, %v1393
        %v1397 = vadd.f32 %v1361, %v1394
        %v1398 = vxor.u32 %v1397, 2147483648
        %v1399 = vmul.f32 %v1398, 1.442695
        %v1400 = vpow.pop %v1399
        %v1401 = vadd.f32 %v1400, 1.0
        %v1402 = vrcp.pop %v1401
        %v1403 = vmul.f32 1.0, %v1402
        %v1404 = vadd.f32 %v1362, %v1395
        %v1405 = vxor.u32 %v1404, 2147483648
        %v1406 = vmul.f32 %v1405, 1.442695
        %v1407 = vpow.pop %v1406
        %v1408 = vadd.f32 %v1407, 1.0
        %v1409 = vrcp.pop %v1408
        %v1410 = vmul.f32 1.0, %v1409
        %v1411 = vmul.f32 %v1403, %v1396
        %v1412 = vadd.f32 %v1363, %v1411
        %v1413 = vtanh.pop %v1412
        %v1414 = vsub.f32 1.0, %v1410
        %v1415 = vmul.f32 %v1414, %v1413
        %v1416 = vmul.f32 %v1410, %v636
        %v1417 = vadd.f32 %v1415, %v1416
        %1418 = vst [vmem:[#allocation2] sm:$0xff] %v1417
        %v1419 = vmul.f32 %v1417, %v1417
        %v1420 = vld [vmem:[#allocation15] sm:$0xff]
        %v1421 = vld [vmem:[#allocation15 + $0x8] sm:$0xff]
        %v1422 = vld [vmem:[#allocation15 + $0x10] sm:$0xff]
        %v1423 = vld [vmem:[#allocation15 + $0x18] sm:$0xff]
        %v1424 = vld [vmem:[#allocation15 + $0x20] sm:$0xff]
        %v1425 = vld [vmem:[#allocation15 + $0x28] sm:$0xff]
        %v1426 = vld [vmem:[#allocation15 + $0x30] sm:$0xff]
        %v1427 = vld [vmem:[#allocation15 + $0x38] sm:$0xff]
        %v1428 = vld [vmem:[#allocation15 + $0x40] sm:$0xff]
        %v1429 = vld [vmem:[#allocation15 + $0x48] sm:$0xff]
        %v1430 = vld [vmem:[#allocation15 + $0x50] sm:$0xff]
        %v1431 = vld [vmem:[#allocation15 + $0x58] sm:$0xff]
        %v1432 = vld [vmem:[#allocation15 + $0x60] sm:$0xff]
        %v1433 = vld [vmem:[#allocation15 + $0x68] sm:$0xff]
        %v1434 = vld [vmem:[#allocation15 + $0x70] sm:$0xff]
        %v1435 = vld [vmem:[#allocation15 + $0x78] sm:$0xff]
        %v1436 = vld [vmem:[#allocation15 + $0x80] sm:$0xff]
        %v1437 = vld [vmem:[#allocation15 + $0x88] sm:$0xff]
        %v1438 = vld [vmem:[#allocation15 + $0x90] sm:$0xff]
        %v1439 = vld [vmem:[#allocation15 + $0x98] sm:$0xff]
        %v1440 = vld [vmem:[#allocation15 + $0xa0] sm:$0xff]
        %v1441 = vld [vmem:[#allocation15 + $0xa8] sm:$0xff]
        %v1442 = vld [vmem:[#allocation15 + $0xb0] sm:$0xff]
        %v1443 = vld [vmem:[#allocation15 + $0xb8] sm:$0xff]
        %v1444 = vld [vmem:[#allocation15 + $0xc0] sm:$0xff]
        %v1445 = vld [vmem:[#allocation15 + $0xc8] sm:$0xff]
        %v1446 = vld [vmem:[#allocation15 + $0xd0] sm:$0xff]
        %v1447 = vld [vmem:[#allocation15 + $0xd8] sm:$0xff]
        %v1448 = vld [vmem:[#allocation15 + $0xe0] sm:$0xff]
        %v1449 = vld [vmem:[#allocation15 + $0xe8] sm:$0xff]
        %v1450 = vld [vmem:[#allocation15 + $0xf0] sm:$0xff]
        %v1451 = vld [vmem:[#allocation15 + $0xf8] sm:$0xff]
        %v1452 = vld [vmem:[#allocation15 + $0x100] sm:$0xff]
        %v1453 = vld [vmem:[#allocation15 + $0x108] sm:$0xff]
        %v1454 = vld [vmem:[#allocation15 + $0x110] sm:$0xff]
        %v1455 = vld [vmem:[#allocation15 + $0x118] sm:$0xff]
        %v1456 = vld [vmem:[#allocation15 + $0x120] sm:$0xff]
        %v1457 = vld [vmem:[#allocation15 + $0x128] sm:$0xff]
        %v1458 = vld [vmem:[#allocation15 + $0x130] sm:$0xff]
        %v1459 = vld [vmem:[#allocation15 + $0x138] sm:$0xff]
        %v1460 = vld [vmem:[#allocation15 + $0x140] sm:$0xff]
        %v1461 = vld [vmem:[#allocation15 + $0x148] sm:$0xff]
        %v1462 = vld [vmem:[#allocation15 + $0x150] sm:$0xff]
        %v1463 = vld [vmem:[#allocation15 + $0x158] sm:$0xff]
        %v1464 = vld [vmem:[#allocation15 + $0x160] sm:$0xff]
        %v1465 = vld [vmem:[#allocation15 + $0x168] sm:$0xff]
        %v1466 = vld [vmem:[#allocation15 + $0x170] sm:$0xff]
        %v1467 = vld [vmem:[#allocation15 + $0x178] sm:$0xff]
        %v1468 = vld [vmem:[#allocation15 + $0x180] sm:$0xff]
        %v1469 = vld [vmem:[#allocation15 + $0x188] sm:$0xff]
        %v1470 = vld [vmem:[#allocation15 + $0x190] sm:$0xff]
        %v1471 = vld [vmem:[#allocation15 + $0x198] sm:$0xff]
        %v1472 = vld [vmem:[#allocation15 + $0x1a0] sm:$0xff]
        %v1473 = vld [vmem:[#allocation15 + $0x1a8] sm:$0xff]
        %v1474 = vld [vmem:[#allocation15 + $0x1b0] sm:$0xff]
        %v1475 = vld [vmem:[#allocation15 + $0x1b8] sm:$0xff]
        %v1476 = vld [vmem:[#allocation15 + $0x1c0] sm:$0xff]
        %v1477 = vld [vmem:[#allocation15 + $0x1c8] sm:$0xff]
        %v1478 = vld [vmem:[#allocation15 + $0x1d0] sm:$0xff]
        %v1479 = vld [vmem:[#allocation15 + $0x1d8] sm:$0xff]
        %v1480 = vld [vmem:[#allocation15 + $0x1e0] sm:$0xff]
        %v1481 = vld [vmem:[#allocation15 + $0x1e8] sm:$0xff]
        %v1482 = vld [vmem:[#allocation15 + $0x1f0] sm:$0xff]
        %v1483 = vld [vmem:[#allocation15 + $0x1f8] sm:$0xff]
        %v1484 = vld [vmem:[%s10] sm:$0x3]
        %v1486 = vlaneseq
        %v1487 = vshrl.u32 %v1486, 7
        %v1488 = vsub.s32 0, %v1487
        %v1489 = vrot.slane %v1484, %v1488
        %v1490 = vlaneseq
        %v1491 = vshrl.u32 %v1490, 7
        %v1492 = vsub.s32 1, %v1491
        %v1493 = vrot.slane %v1484, %v1492
        %1496 = vmatprep.subr.mxu0 %v1451
        %1497 = vmatpush1.msra.mxu0 %v1450
        %1498 = vmatprep.subr.mxu0 %v1449
        %1499 = vmatpush1.msra.mxu0 %v1448
        %1500 = vmatprep.subr.mxu0 %v1447
        %1501 = vmatpush1.msra.mxu0 %v1446
        %1502 = vmatprep.subr.mxu0 %v1445
        %1503 = vmatpush1.msra.mxu0 %v1444
        %1504 = vmatprep.subr.mxu0 %v1443
        %1505 = vmatpush1.msra.mxu0 %v1442
        %1506 = vmatprep.subr.mxu0 %v1441
        %1507 = vmatpush1.msra.mxu0 %v1440
        %1508 = vmatprep.subr.mxu0 %v1439
        %1509 = vmatpush1.msra.mxu0 %v1438
        %1510 = vmatprep.subr.mxu0 %v1437
        %1511 = vmatpush1.msra.mxu0 %v1436
        %1512 = vmatprep.subr.mxu0 %v1435
        %1513 = vmatpush1.msra.mxu0 %v1434
        %1514 = vmatprep.subr.mxu0 %v1433
        %1515 = vmatpush1.msra.mxu0 %v1432
        %1516 = vmatprep.subr.mxu0 %v1431
        %1517 = vmatpush1.msra.mxu0 %v1430
        %1518 = vmatprep.subr.mxu0 %v1429
        %1519 = vmatpush1.msra.mxu0 %v1428
        %1520 = vmatprep.subr.mxu0 %v1427
        %1521 = vmatpush1.msra.mxu0 %v1426
        %1522 = vmatprep.subr.mxu0 %v1425
        %1523 = vmatpush1.msra.mxu0 %v1424
        %1524 = vmatprep.subr.mxu0 %v1423
        %1525 = vmatpush1.msra.mxu0 %v1422
        %1526 = vmatprep.subr.mxu0 %v1421
        %1527 = vmatpush1.msra.mxu0 %v1420
        %1528 = vmatprep.subr.mxu0 %v1483
        %1529 = vmatpush2.msra.mxu0 %v1482
        %1530 = vmatprep.subr.mxu0 %v1481
        %1531 = vmatpush2.msra.mxu0 %v1480
        %1532 = vmatprep.subr.mxu0 %v1479
        %1533 = vmatpush2.msra.mxu0 %v1478
        %1534 = vmatprep.subr.mxu0 %v1477
        %1535 = vmatpush2.msra.mxu0 %v1476
        %1536 = vmatprep.subr.mxu0 %v1475
        %1537 = vmatpush2.msra.mxu0 %v1474
        %1538 = vmatprep.subr.mxu0 %v1473
        %1539 = vmatpush2.msra.mxu0 %v1472
        %1540 = vmatprep.subr.mxu0 %v1471
        %1541 = vmatpush2.msra.mxu0 %v1470
        %1542 = vmatprep.subr.mxu0 %v1469
        %1543 = vmatpush2.msra.mxu0 %v1468
        %1544 = vmatprep.subr.mxu0 %v1467
        %1545 = vmatpush2.msra.mxu0 %v1466
        %1546 = vmatprep.subr.mxu0 %v1465
        %1547 = vmatpush2.msra.mxu0 %v1464
        %1548 = vmatprep.subr.mxu0 %v1463
        %1549 = vmatpush2.msra.mxu0 %v1462
        %1550 = vmatprep.subr.mxu0 %v1461
        %1551 = vmatpush2.msra.mxu0 %v1460
        %1552 = vmatprep.subr.mxu0 %v1459
        %1553 = vmatpush2.msra.mxu0 %v1458
        %1554 = vmatprep.subr.mxu0 %v1457
        %1555 = vmatpush2.msra.mxu0 %v1456
        %1556 = vmatprep.subr.mxu0 %v1455
        %1557 = vmatpush2.msra.mxu0 %v1454
        %1558 = vmatprep.subr.mxu0 %v1453
        %1559 = vmatpush2.msra.mxu0 %v1452
        %1560 = vmatprep.mubr.f32.mxu0 %v1419
        %1561 = vmatmul.mubr.f32.gmra.mxu0 %v1417
        %v1562 = vpop.f32.mrf.mxu0
        %v1563 = vadd.f32 %v1489, %v1562
        %v1564 = vpop.f32.mrf.mxu0
        %v1565 = vadd.f32 %v1493, %v1564
        %1566 = vdwg.mxu0
        %v1567 = vadd.f32 %v1565, 1e-08
        %v1568 = vrsqrt.pop %v1567
        %v1569 = vmul.f32 %v1567, %v1568
        %vm1570 = vcmp.eq.f32.partialorder %v1567, inf
        %v1571 = vsel %vm1570, %v1567, %v1569
        %vm1572 = vcmp.eq.f32.partialorder %v1567, 0.0
        %v1573 = vand.u32 %v1567, 2147483648
        %v1574 = vsel %vm1572, %v1573, %v1571
        %v1575 = vld [vmem:[%s562] sm:$0xff]
        %v1576 = vmul.f32 %v1574, %v1575
        %v1577 = vadd.f32 %v1563, %v1576
        %1578 = vst [vmem:[%s627] sm:$0xff] %v1577
        %p1579 = scmp.eq.s32.totalorder %s42, 7
        // Predicated region
        $region101: #{tpu_custom_call.1} parent=63 // pred_check
          %p1580 = pneg %p1579
        $region102: #{tpu_custom_call.1} parent=63 // pred_check_branch
          %1582 = sbr.rel (%p1580) target = $region104
        $region103: #{tpu_custom_call.1} parent=63 // pred_region
          %1583 = vst [vmem:[#allocation18] sm:$0xff] %v1417
        $region104: #{tpu_custom_call.1} parent=63 // pred_fallthru
          _
        %s1584 = sand.u32 %s323, 1
        %s1585 = scalar_lea.sflag [#allocation5], %s1584
        %s1586 = sand.u32 %s323, 1
        %s1587 = smul.addr %s1586, 8
        %s1588 = scalar_lea.vmem [#allocation17], %s1587
        // Predicated region
        $region105: #{tpu_custom_call.1} parent=63 // pred_check
          %p1589 = pneg %p333
        $region106: #{tpu_custom_call.1} parent=63 // pred_check_branch
          %1591 = sbr.rel (%p1589) target = $region108
        $region107: #{tpu_custom_call.1} parent=63 // pred_region
          %s1593 = ssub.s32 128, 128
          %1594 = vsyncadd %s1585, %s1593
          %s1595 = sadd.s32 %s41, %s42
          %s1596 = smul.addr %s1595, 128
          %s1597 = scalar_lea.hbm %s11, %s1596
          %s1599 = sshll.u32 %s1588, 4
          %s1600 = int_to_ptr.vmem [resolvable:$true] %s1599
          %1602 = dma.vmem_to_hbm [thread:$0]  %s1600, 128, %s1597, %s1585
        $region108: #{tpu_custom_call.1} parent=63 // pred_fallthru
          _
        // Predicated region
        $region109: #{tpu_custom_call.1} parent=63 // pred_check
          %p1603 = pneg %p359
        $region110: #{tpu_custom_call.1} parent=63 // pred_check_branch
          %1605 = sbr.rel (%p1603) target = $region112
        $region111: #{tpu_custom_call.1} parent=63 // pred_region
          %s1607 = ssub.s32 128, 128
          %1608 = vsyncadd [#allocation19], %s1607
          %s1609 = smul.addr %s41, 128
          %s1610 = scalar_lea.hbm %s12, %s1609
          %s1612 = sshll.u32 [#allocation18], 4
          %s1613 = int_to_ptr.vmem [resolvable:$true] %s1612
          %1615 = dma.vmem_to_hbm [thread:$0]  %s1613, 128, %s1610, [#allocation19]
        $region112: #{tpu_custom_call.1} parent=63 // pred_fallthru
          _
        // Predicated region
        $region113: #{tpu_custom_call.1} parent=63 // pred_check
          %p1616 = pneg %p359
        $region114: #{tpu_custom_call.1} parent=63 // pred_check_branch
          %1618 = sbr.rel (%p1616) target = $region116
        $region115: #{tpu_custom_call.1} parent=63 // pred_region
          %1619 = dma.done [#allocation19], 128
        $region116: #{tpu_custom_call.1} parent=63 // pred_fallthru
          _
      $region64: #{tpu_custom_call.1} parent=5 // pred_fallthru
        _
      %p1620 = scmp.le.s32.totalorder 2, %s32
      // Predicated region
      $region117: #{tpu_custom_call.1} parent=5 // pred_check
        %p1621 = pneg %p1620
      $region118: #{tpu_custom_call.1} parent=5 // pred_check_branch
        %1623 = sbr.rel (%p1621) target = $region120
      $region119: #{tpu_custom_call.1} parent=5 // pred_region
        %s1624 = ssub.s32 %s32, 2
        // Predicated region
        $region121: #{tpu_custom_call.1} parent=119 // pred_check
          %p1625 = pneg %p339
        $region122: #{tpu_custom_call.1} parent=119 // pred_check_branch
          %1627 = sbr.rel (%p1625) target = $region124
        $region123: #{tpu_custom_call.1} parent=119 // pred_region
          %s1628 = sand.u32 %s324, 1
          %s1629 = scalar_lea.sflag [#allocation5], %s1628
          %s1630 = sand.u32 %s324, 1
          %s1631 = smul.addr %s1630, 8
          %s1632 = scalar_lea.vmem [#allocation17], %s1631
          %1633 = dma.done %s1629, 128
        $region124: #{tpu_custom_call.1} parent=119 // pred_fallthru
          _
      $region120: #{tpu_custom_call.1} parent=5 // pred_fallthru
        _
    $region6: #{tpu_custom_call.1} parent=1 // loop_footer
      %s36 = sadd.s32 1, %s32
    $region7: #{tpu_custom_call.1} parent=1 // loop_footer_branch
      %31 = sbr.rel target = $region3
    $region8: #{tpu_custom_call.1} parent=1 // loop_exit
      _
    %1634 = vsyncpa [#allocation4], 1
    %s1635 = scalar_lea.sflag [#allocation4], 1
    %1636 = vsyncpa %s1635, 1
    %1637 = vsyncpa [#allocation7], 1
    %s1638 = scalar_lea.sflag [#allocation7], 1
    %1639 = vsyncpa %s1638, 1
    %1640 = vsyncpa [#allocation10], 1
    %s1641 = scalar_lea.sflag [#allocation10], 1
    %1642 = vsyncpa %s1641, 1
    %1643 = vsyncpa [#allocation13], 1
    %1644 = vsyncpa [#allocation16], 1
    %1645 = vsyncpa [#allocation5], 1
    %s1646 = scalar_lea.sflag [#allocation5], 1
    %1647 = vsyncpa %s1646, 1
    %1648 = vsyncpa [#allocation19], 1

</llo_original>
